<compile_context>
chip_gen: v7x
topology: tpu7x:2x2x1
jax: 0.10.0
libtpu: 0.0.40
codegen_flags: <defaults>
</compile_context>

<pallas_src>
import functools

import jax
import jax.numpy as jnp
from jax.experimental import pallas as pl
from jax.experimental.pallas import tpu as pltpu


def _round_up(x, m):
    return -(-x // m) * m


# ----------------------------------------------------------------------------- #
# Fused encoder + decoder kernel (everything resident in VMEM per batch tile).   #
# ----------------------------------------------------------------------------- #
def _teja_vae_kernel(x_ref, wt_ref, bt_ref, w1_ref, b1_ref,
                     wh_ref, bh_ref,
                     wd1_ref, bd1_ref, wd2_ref, bd2_ref, kr_ref,
                     enc_ref, recon_ref):
    # ---------------- encoder ----------------
    x = x_ref[...]                                       # (TN, L_pad)

    # Conv1d as ONE MXU matmul against the Toeplitz/im2col weight; the result is
    # already the flattened (TN, OC*lout_pad) layout.  Bias is a row add.
    flat = jnp.maximum(
        jnp.dot(x, wt_ref[...], preferred_element_type=jnp.float32) + bt_ref[...],
        0.0)                                             # (TN, OC*lout_pad)

    h = jnp.maximum(
        jnp.dot(flat, w1_ref[...], preferred_element_type=jnp.float32) + b1_ref[...],
        0.0)                                             # (TN, H)

    # One fused head matmul -> [means | log_vars | labels | zero-pad], 128 lanes.
    heads = jnp.dot(h, wh_ref[...], preferred_element_type=jnp.float32) + bh_ref[...]
    # TODO(synk): label-head activation of teja_encoder_cpd is unknown; emit raw logits.
    enc_ref[...] = heads                                 # single lane-dense store

    # ---------------- decoder ----------------
    # TODO(synk): decoder consumes means/log_vars deterministically (no
    # reparameterization sampling) — matches the included reference; verify vs
    # the original teja_decoder_cpd if it samples z internally.
    # wd1 has zero rows for the label/pad lanes, so feeding the full head block
    # is exactly z = [means | log_vars] through the block-diagonal MLPs.
    hd = jnp.maximum(
        jnp.dot(heads, wd1_ref[...], preferred_element_type=jnp.float32) + bd1_ref[...],
        0.0)                                             # (TN, 2*Hd) = [hm | hv]
    a = jnp.dot(hd, wd2_ref[...], preferred_element_type=jnp.float32) + bd2_ref[...]

    # exp() only on the variance half, selected with a lane mask (no slice/concat).
    # Note: exp is evaluated on the mean half too but discarded by the where;
    # harmless (finite values), do not turn the select into arithmetic.
    r = wd2_ref.shape[1] // 2
    col = jax.lax.broadcasted_iota(jnp.int32, a.shape, 1)
    a_cat = jnp.where(col < r, a, jnp.exp(a))            # [a_mean | a_var]

    # CP reconstruction against blockdiag(kr_mean, kr_var): one lane-dense
    # (TN, 2*D1*D2) store, split into mean/var in the wrapper.
    recon_ref[...] = jnp.dot(a_cat, kr_ref[...], preferred_element_type=jnp.float32)


# ----------------------------------------------------------------------------- #
# Wrapper: weight prep (Toeplitz conv / transpose / concat / block-diag /        #
# Khatri-Rao / padding) + batch-tiled pallas_call.                               #
# ----------------------------------------------------------------------------- #
def _row_spec(shape, tn):
    nd = len(shape)
    return pl.BlockSpec((tn,) + shape[1:], lambda i: (i,) + (0,) * (nd - 1))


def _const_spec(shape):
    nd = len(shape)
    return pl.BlockSpec(shape, lambda i: (0,) * nd)


def teja_vae_cpd_forward(x, params, *, tile_n=256):
    """x: (N, D1, D2) f32. Returns (mean_tensor, var_tensor, means, log_vars, labels)."""
    n, d1, d2 = x.shape
    dd = d1 * d2
    p = params

    oc, k = p["conv_w"].shape
    hidden = p["enc_w1"].shape[0]
    rank = p["enc_wm"].shape[0]
    n_classes = p["enc_wl"].shape[0]
    dec_hidden = p["dec_w1m"].shape[0]

    lout = dd - k + 1                         # true Conv1d output length (stride=1)
    lout_pad = _round_up(lout, 128)           # pad conv output length to lane multiple
    l_pad = _round_up(dd, 128)                # pad input length to lane multiple
    head_pad = _round_up(2 * rank + n_classes, 128)

    # ---- batch tiling: big tile for MXU occupancy, >=2 grid steps when possible ----
    np8 = _round_up(n, 8)
    tn = max(8, min(_round_up(tile_n, 8), np8))
    if tn == np8 and np8 >= 16:               # keep both v7x TensorCores busy
        tn = max(8, _round_up(np8 // 2, 8))
    np_ = _round_up(n, tn)

    # ---- input: flatten, zero-pad batch and length ----
    x_flat = x.reshape(n, dd).astype(jnp.float32)
    x_pad = jnp.zeros((np_, l_pad), jnp.float32).at[:n, :dd].set(x_flat)

    # ---- Conv1d as a Toeplitz / im2col weight: flat = relu(x @ T + bt) ----
    # T[i, o*lout_pad + j] = conv_w[o, i - j] for 0 <= i-j < k and j < lout, else 0.
    conv_w = p["conv_w"].astype(jnp.float32)                       # (OC, K)
    i_idx = jnp.arange(dd)[:, None]                                # (L, 1)
    j_idx = jnp.arange(lout_pad)[None, :]                          # (1, lout_pad)
    tap = i_idx - j_idx
    valid = (tap >= 0) & (tap < k) & (j_idx < lout)
    tap_c = jnp.clip(tap, 0, k - 1)
    toe = jnp.where(valid[None, :, :], conv_w[:, tap_c], 0.0)      # (OC, L, lout_pad)
    toe = jnp.transpose(toe, (1, 0, 2)).reshape(dd, oc * lout_pad)
    toe = jnp.pad(toe, ((0, l_pad - dd), (0, 0)))                  # (L_pad, OC*lout_pad)

    mask_j = (jnp.arange(lout_pad) < lout).astype(jnp.float32)
    bt = (p["conv_b"].reshape(oc, 1) * mask_j[None, :]).reshape(1, oc * lout_pad)

    # ---- encoder linear: (H, OC*Lout) -> (OC*lout_pad, H) with zero padded rows ----
    w1_t = p["enc_w1"].T.reshape(oc, lout, hidden)
    w1_t = jnp.pad(w1_t, ((0, 0), (0, lout_pad - lout), (0, 0)))
    w1_t = w1_t.reshape(oc * lout_pad, hidden)
    b1 = p["enc_b1"]                                               # (1, H)

    # ---- fused heads: [means | log_vars | labels | 0-pad] padded to 128 lanes ----
    w_heads = jnp.concatenate([p["enc_wm"].T, p["enc_wv"].T, p["enc_wl"].T], axis=1)
    w_heads = jnp.pad(w_heads, ((0, 0), (0, head_pad - (2 * rank + n_classes))))
    b_heads = jnp.concatenate([p["enc_bm"], p["enc_bv"], p["enc_bl"]], axis=1)
    b_heads = jnp.pad(b_heads, ((0, 0), (0, head_pad - (2 * rank + n_classes))))

    # ---- decoder weights: block-diagonal [mean branch | var branch] ----
    zero_rh = jnp.zeros((rank, dec_hidden), jnp.float32)
    wd1 = jnp.concatenate(
        [jnp.concatenate([p["dec_w1m"].T, zero_rh], axis=1),
         jnp.concatenate([zero_rh, p["dec_w1v"].T], axis=1)], axis=0)   # (2R, 2Hd)
    # zero rows for the label / pad lanes of the head block:
    wd1 = jnp.pad(wd1, ((0, head_pad - 2 * rank), (0, 0)))              # (head_pad, 2Hd)
    bd1 = jnp.concatenate([p["dec_b1m"], p["dec_b1v"]], axis=1)         # (1, 2Hd)

    zero_hr = jnp.zeros((dec_hidden, rank), jnp.float32)
    wd2 = jnp.concatenate(
        [jnp.concatenate([p["dec_w2m"].T, zero_hr], axis=1),
         jnp.concatenate([zero_hr, p["dec_w2v"].T], axis=1)], axis=0)   # (2Hd, 2R)
    bd2 = jnp.concatenate([p["dec_b2m"], p["dec_b2v"]], axis=1)         # (1, 2R)

    # Khatri-Rao factors, built directly in (R, D1*D2) layout, block-diagonal.
    kr_mean = (p["fac_b_mean"].T[:, :, None]
               * p["fac_c_mean"].T[:, None, :]).reshape(rank, dd)
    kr_var = (jnp.exp(p["fac_b_lv"]).T[:, :, None]
              * jnp.exp(p["fac_c_lv"]).T[:, None, :]).reshape(rank, dd)
    zero_rd = jnp.zeros((rank, dd), jnp.float32)
    kr_bd = jnp.concatenate(
        [jnp.concatenate([kr_mean, zero_rd], axis=1),
         jnp.concatenate([zero_rd, kr_var], axis=1)], axis=0)           # (2R, 2*dd)

    # ---- one fused pallas_call, batch tiled on the grid ----
    inputs = (x_pad, toe, bt, w1_t, b1, w_heads, b_heads,
              wd1, bd1, wd2, bd2, kr_bd)
    in_specs = [_row_spec(x_pad.shape, tn)] + [_const_spec(a.shape) for a in inputs[1:]]

    out_shapes = (
        jax.ShapeDtypeStruct((np_, head_pad), jnp.float32),    # [means|log_vars|labels|0]
        jax.ShapeDtypeStruct((np_, 2 * dd), jnp.float32),      # [mean_flat | var_flat]
    )
    out_specs = tuple(_row_spec(s.shape, tn) for s in out_shapes)

    enc_out, recon = pl.pallas_call(
        _teja_vae_kernel,
        out_shape=out_shapes,
        grid=(np_ // tn,),
        in_specs=in_specs,
        out_specs=out_specs,
        compiler_params=pltpu.CompilerParams(
            dimension_semantics=("parallel",)),
    )(*inputs)

    means = enc_out[:n, :rank]
    log_vars = enc_out[:n, rank:2 * rank]
    labels = enc_out[:n, 2 * rank:2 * rank + n_classes]
    mean_tensor = recon[:n, :dd].reshape(n, d1, d2)
    var_tensor = recon[:n, dd:2 * dd].reshape(n, d1, d2)
    return mean_tensor, var_tensor, means, log_vars, labels


# ----------------------------------------------------------------------------- #
# Pure-JAX reference of the same forward semantics (for validation only).        #
# ----------------------------------------------------------------------------- #
def _reference_forward(x, p):
    n, d1, d2 = x.shape
    xf = x.reshape(n, d1 * d2)
    oc, k = p["conv_w"].shape
    lout = xf.shape[1] - k + 1
    acc = jnp.zeros((n, oc, lout), jnp.float32)
    for tap in range(k):
        acc = acc + xf[:, tap:tap + lout][:, None, :] * p["conv_w"][:, tap][None, :, None]
    conv = jnp.maximum(acc + p["conv_b"].reshape(1, oc, 1), 0.0)
    flat = conv.reshape(n, oc * lout)
    h = jnp.maximum(flat @ p["enc_w1"].T + p["enc_b1"], 0.0)
    means = h @ p["enc_wm"].T + p["enc_bm"]
    log_vars = h @ p["enc_wv"].T + p["enc_bv"]
    labels = h @ p["enc_wl"].T + p["enc_bl"]
    hm = jnp.maximum(means @ p["dec_w1m"].T + p["dec_b1m"], 0.0)
    a_mean = hm @ p["dec_w2m"].T + p["dec_b2m"]
    hv = jnp.maximum(log_vars @ p["dec_w1v"].T + p["dec_b1v"], 0.0)
    a_var = jnp.exp(hv @ p["dec_w2v"].T + p["dec_b2v"])
    r = a_mean.shape[1]
    kr_mean = (p["fac_b_mean"][:, None, :] * p["fac_c_mean"][None, :, :]).reshape(d1 * d2, r)
    kr_var = (jnp.exp(p["fac_b_lv"])[:, None, :]
              * jnp.exp(p["fac_c_lv"])[None, :, :]).reshape(d1 * d2, r)
    mean_t = (a_mean @ kr_mean.T).reshape(n, d1, d2)
    var_t = (a_var @ kr_var.T).reshape(n, d1, d2)
    return mean_t, var_t, means, log_vars, labels


# ----------------------------------------------------------------------------- #
# Deterministic parameter construction (PyTorch default-style uniform init).     #
# ----------------------------------------------------------------------------- #
def init_params(key, *, other_dims, output_channels, kernel_size,
                enc_hidden, dec_hidden, rank, n_classes):
    d1, d2 = other_dims
    l = d1 * d2
    lout = l - kernel_size + 1
    flat_dim = output_channels * lout

    def lin(key, out_f, in_f):
        kw, kb = jax.random.split(key)
        bound = 1.0 / jnp.sqrt(in_f)
        w = jax.random.uniform(kw, (out_f, in_f), jnp.float32, -bound, bound)
        b = jax.random.uniform(kb, (1, out_f), jnp.float32, -bound, bound)
        return w, b

    keys = jax.random.split(key, 12)
    p = {}
    bound = 1.0 / jnp.sqrt(kernel_size)
    p["conv_w"] = jax.random.uniform(keys[0], (output_channels, kernel_size),
                                     jnp.float32, -bound, bound)
    p["conv_b"] = jax.random.uniform(keys[1], (1, output_channels),
                                     jnp.float32, -bound, bound)
    p["enc_w1"], p["enc_b1"] = lin(keys[2], enc_hidden, flat_dim)
    p["enc_wm"], p["enc_bm"] = lin(keys[3], rank, enc_hidden)
    p["enc_wv"], p["enc_bv"] = lin(keys[4], rank, enc_hidden)
    p["enc_wl"], p["enc_bl"] = lin(keys[5], n_classes, enc_hidden)
    p["dec_w1m"], p["dec_b1m"] = lin(keys[6], dec_hidden, rank)
    p["dec_w2m"], p["dec_b2m"] = lin(keys[7], rank, dec_hidden)
    p["dec_w1v"], p["dec_b1v"] = lin(keys[8], dec_hidden, rank)
    p["dec_w2v"], p["dec_b2v"] = lin(keys[9], rank, dec_hidden)
    p["fac_b_mean"] = 0.1 * jax.random.normal(keys[10], (d1, rank), jnp.float32)
    p["fac_c_mean"] = 0.1 * jax.random.normal(keys[11], (d2, rank), jnp.float32)
    p["fac_b_lv"] = jnp.zeros((d1, rank), jnp.float32)
    p["fac_c_lv"] = jnp.zeros((d2, rank), jnp.float32)
    return p


if __name__ == "__main__":
    N = 8
    OTHER_DIMS = (8, 16)        # D1, D2 -> flattened length 128
    OUTPUT_CHANNELS = 8
    KERNEL_SIZE = 5
    ENC_HIDDEN = 32
    DEC_HIDDEN = 32
    RANK = 3
    N_CLASSES = 4

    key = jax.random.PRNGKey(0)
    k_x, k_p = jax.random.split(key)
    x = jax.random.normal(k_x, (N,) + OTHER_DIMS, jnp.float32)
    params = init_params(k_p, other_dims=OTHER_DIMS, output_channels=OUTPUT_CHANNELS,
                         kernel_size=KERNEL_SIZE, enc_hidden=ENC_HIDDEN,
                         dec_hidden=DEC_HIDDEN, rank=RANK, n_classes=N_CLASSES)

    fwd = jax.jit(functools.partial(teja_vae_cpd_forward))
    outs = fwd(x, params)
    jax.block_until_ready(outs)
    mean_tensor, var_tensor, means, log_vars, labels = outs

    assert mean_tensor.shape == (N,) + OTHER_DIMS
    assert var_tensor.shape == (N,) + OTHER_DIMS
    assert means.shape == (N, RANK) and log_vars.shape == (N, RANK)
    assert labels.shape == (N, N_CLASSES)

    # Validate against a pure-JAX reference of the same forward pass.
    # (Tolerance allows for MXU default-precision accumulation differences
    #  between the fused Toeplitz conv matmul and the per-tap reference.)
    ref = _reference_forward(x, params)
    for got, want in zip(outs, ref):
        assert jnp.allclose(got, want, rtol=1e-2, atol=1e-2), "mismatch vs reference"

    print("KERNEL_OK")
</pallas_src>

<mosaic_0001>
module attributes {stable_mosaic.version = 11 : i64} {
  func.func @_teja_vae_kernel(%arg0: i32, %arg1: memref<8x128xf32, #tpu.memory_space<vmem>>, %arg2: memref<128x1024xf32, #tpu.memory_space<vmem>>, %arg3: memref<1x1024xf32, #tpu.memory_space<vmem>>, %arg4: memref<1024x32xf32, #tpu.memory_space<vmem>>, %arg5: memref<1x32xf32, #tpu.memory_space<vmem>>, %arg6: memref<32x128xf32, #tpu.memory_space<vmem>>, %arg7: memref<1x128xf32, #tpu.memory_space<vmem>>, %arg8: memref<128x64xf32, #tpu.memory_space<vmem>>, %arg9: memref<1x64xf32, #tpu.memory_space<vmem>>, %arg10: memref<64x6xf32, #tpu.memory_space<vmem>>, %arg11: memref<1x6xf32, #tpu.memory_space<vmem>>, %arg12: memref<6x256xf32, #tpu.memory_space<vmem>>, %arg13: memref<8x128xf32, #tpu.memory_space<vmem>>, %arg14: memref<8x256xf32, #tpu.memory_space<vmem>>) attributes {dimension_semantics = [#tpu.dimension_semantics<parallel>], iteration_bounds = array<i64: 1>, scalar_prefetch = 0 : i64, scratch_operands = 0 : i64, tpu.core_type = #tpu.core_type<tc>, window_params = [{transform_indices = @transform_0, window_bounds = array<i64: 8, 128>}, {pipeline_mode = #tpu.pipeline_mode<synchronous>, transform_indices = @transform_1, window_bounds = array<i64: 128, 1024>}, {pipeline_mode = #tpu.pipeline_mode<synchronous>, transform_indices = @transform_2, window_bounds = array<i64: 1, 1024>}, {pipeline_mode = #tpu.pipeline_mode<synchronous>, transform_indices = @transform_3, window_bounds = array<i64: 1024, 32>}, {pipeline_mode = #tpu.pipeline_mode<synchronous>, transform_indices = @transform_4, window_bounds = array<i64: 1, 32>}, {pipeline_mode = #tpu.pipeline_mode<synchronous>, transform_indices = @transform_5, window_bounds = array<i64: 32, 128>}, {pipeline_mode = #tpu.pipeline_mode<synchronous>, transform_indices = @transform_6, window_bounds = array<i64: 1, 128>}, {pipeline_mode = #tpu.pipeline_mode<synchronous>, transform_indices = @transform_7, window_bounds = array<i64: 128, 64>}, {pipeline_mode = #tpu.pipeline_mode<synchronous>, transform_indices = @transform_8, window_bounds = array<i64: 1, 64>}, {pipeline_mode = #tpu.pipeline_mode<synchronous>, transform_indices = @transform_9, window_bounds = array<i64: 64, 6>}, {pipeline_mode = #tpu.pipeline_mode<synchronous>, transform_indices = @transform_10, window_bounds = array<i64: 1, 6>}, {pipeline_mode = #tpu.pipeline_mode<synchronous>, transform_indices = @transform_11, window_bounds = array<i64: 6, 256>}, {transform_indices = @transform_12, window_bounds = array<i64: 8, 128>}, {transform_indices = @transform_13, window_bounds = array<i64: 8, 256>}]} {
    %c0 = arith.constant 0 : index
    %c0_0 = arith.constant 0 : index
    %0 = vector.load %arg1[%c0, %c0_0] : memref<8x128xf32, #tpu.memory_space<vmem>>, vector<8x128xf32>
    %c0_1 = arith.constant 0 : index
    %c0_2 = arith.constant 0 : index
    %1 = vector.load %arg2[%c0_1, %c0_2] : memref<128x1024xf32, #tpu.memory_space<vmem>>, vector<128x1024xf32>
    %cst = arith.constant dense<0.000000e+00> : vector<8x1024xf32>
    %2 = tpu.matmul %0, %1, %cst {dimension_numbers = #tpu.dot_dimension_numbers<[1], [0], [0], [1], [0, 0, 1, 1], [], []>} : vector<8x128xf32>, vector<128x1024xf32>, vector<8x1024xf32> -> vector<8x1024xf32>
    %c0_3 = arith.constant 0 : index
    %c0_4 = arith.constant 0 : index
    %3 = vector.load %arg3[%c0_3, %c0_4] : memref<1x1024xf32, #tpu.memory_space<vmem>>, vector<1x1024xf32>
    %4 = vector.broadcast %3 : vector<1x1024xf32> to vector<8x1024xf32>
    %5 = arith.addf %2, %4 : vector<8x1024xf32>
    %cst_5 = arith.constant 0.000000e+00 : f32
    %6 = vector.broadcast %cst_5 : f32 to vector<8x1024xf32>
    %7 = arith.maximumf %5, %6 : vector<8x1024xf32>
    %c0_6 = arith.constant 0 : index
    %c0_7 = arith.constant 0 : index
    %8 = vector.load %arg4[%c0_6, %c0_7] : memref<1024x32xf32, #tpu.memory_space<vmem>>, vector<1024x32xf32>
    %cst_8 = arith.constant dense<0.000000e+00> : vector<8x32xf32>
    %9 = tpu.matmul %7, %8, %cst_8 {dimension_numbers = #tpu.dot_dimension_numbers<[1], [0], [0], [1], [0, 0, 1, 1], [], []>} : vector<8x1024xf32>, vector<1024x32xf32>, vector<8x32xf32> -> vector<8x32xf32>
    %c0_9 = arith.constant 0 : index
    %c0_10 = arith.constant 0 : index
    %10 = vector.load %arg5[%c0_9, %c0_10] : memref<1x32xf32, #tpu.memory_space<vmem>>, vector<1x32xf32>
    %11 = vector.broadcast %10 : vector<1x32xf32> to vector<8x32xf32>
    %12 = arith.addf %9, %11 : vector<8x32xf32>
    %cst_11 = arith.constant 0.000000e+00 : f32
    %13 = vector.broadcast %cst_11 : f32 to vector<8x32xf32>
    %14 = arith.maximumf %12, %13 : vector<8x32xf32>
    %c0_12 = arith.constant 0 : index
    %c0_13 = arith.constant 0 : index
    %15 = vector.load %arg6[%c0_12, %c0_13] : memref<32x128xf32, #tpu.memory_space<vmem>>, vector<32x128xf32>
    %cst_14 = arith.constant dense<0.000000e+00> : vector<8x128xf32>
    %16 = tpu.matmul %14, %15, %cst_14 {dimension_numbers = #tpu.dot_dimension_numbers<[1], [0], [0], [1], [0, 0, 1, 1], [], []>} : vector<8x32xf32>, vector<32x128xf32>, vector<8x128xf32> -> vector<8x128xf32>
    %c0_15 = arith.constant 0 : index
    %c0_16 = arith.constant 0 : index
    %17 = vector.load %arg7[%c0_15, %c0_16] : memref<1x128xf32, #tpu.memory_space<vmem>>, vector<1x128xf32>
    %18 = vector.broadcast %17 : vector<1x128xf32> to vector<8x128xf32>
    %19 = arith.addf %16, %18 : vector<8x128xf32>
    %c0_17 = arith.constant 0 : index
    %c0_18 = arith.constant 0 : index
    %20 = vector.load %arg13[%c0_17, %c0_18] : memref<8x128xf32, #tpu.memory_space<vmem>>, vector<8x128xf32>
    tpu.vector_store %arg13[%c0_17, %c0_18], %19 {strides = array<i32>} : memref<8x128xf32, #tpu.memory_space<vmem>>, vector<8x128xf32>,
    %c0_19 = arith.constant 0 : index
    %c0_20 = arith.constant 0 : index
    %21 = vector.load %arg8[%c0_19, %c0_20] : memref<128x64xf32, #tpu.memory_space<vmem>>, vector<128x64xf32>
    %cst_21 = arith.constant dense<0.000000e+00> : vector<8x64xf32>
    %22 = tpu.matmul %19, %21, %cst_21 {dimension_numbers = #tpu.dot_dimension_numbers<[1], [0], [0], [1], [0, 0, 1, 1], [], []>} : vector<8x128xf32>, vector<128x64xf32>, vector<8x64xf32> -> vector<8x64xf32>
    %c0_22 = arith.constant 0 : index
    %c0_23 = arith.constant 0 : index
    %23 = vector.load %arg9[%c0_22, %c0_23] : memref<1x64xf32, #tpu.memory_space<vmem>>, vector<1x64xf32>
    %24 = vector.broadcast %23 : vector<1x64xf32> to vector<8x64xf32>
    %25 = arith.addf %22, %24 : vector<8x64xf32>
    %cst_24 = arith.constant 0.000000e+00 : f32
    %26 = vector.broadcast %cst_24 : f32 to vector<8x64xf32>
    %27 = arith.maximumf %25, %26 : vector<8x64xf32>
    %c0_25 = arith.constant 0 : index
    %c0_26 = arith.constant 0 : index
    %28 = vector.load %arg10[%c0_25, %c0_26] : memref<64x6xf32, #tpu.memory_space<vmem>>, vector<64x6xf32>
    %cst_27 = arith.constant dense<0.000000e+00> : vector<8x6xf32>
    %29 = tpu.matmul %27, %28, %cst_27 {dimension_numbers = #tpu.dot_dimension_numbers<[1], [0], [0], [1], [0, 0, 1, 1], [], []>} : vector<8x64xf32>, vector<64x6xf32>, vector<8x6xf32> -> vector<8x6xf32>
    %c0_28 = arith.constant 0 : index
    %c0_29 = arith.constant 0 : index
    %30 = vector.load %arg11[%c0_28, %c0_29] : memref<1x6xf32, #tpu.memory_space<vmem>>, vector<1x6xf32>
    %31 = vector.broadcast %30 : vector<1x6xf32> to vector<8x6xf32>
    %32 = arith.addf %29, %31 : vector<8x6xf32>
    %33 = tpu.iota {dimensions = array<i32: 1>} : vector<8x6xi32>
    %c3_i32 = arith.constant 3 : i32
    %34 = vector.broadcast %c3_i32 : i32 to vector<8x6xi32>
    %35 = arith.cmpi slt, %33, %34 : vector<8x6xi32>
    %36 = math.exp %32 : vector<8x6xf32>
    %37 = arith.select %35, %32, %36 : vector<8x6xi1>, vector<8x6xf32>
    %c0_30 = arith.constant 0 : index
    %c0_31 = arith.constant 0 : index
    %38 = vector.load %arg12[%c0_30, %c0_31] : memref<6x256xf32, #tpu.memory_space<vmem>>, vector<6x256xf32>
    %cst_32 = arith.constant dense<0.000000e+00> : vector<8x256xf32>
    %39 = tpu.matmul %37, %38, %cst_32 {dimension_numbers = #tpu.dot_dimension_numbers<[1], [0], [0], [1], [0, 0, 1, 1], [], []>} : vector<8x6xf32>, vector<6x256xf32>, vector<8x256xf32> -> vector<8x256xf32>
    %c0_33 = arith.constant 0 : index
    %c0_34 = arith.constant 0 : index
    %40 = vector.load %arg14[%c0_33, %c0_34] : memref<8x256xf32, #tpu.memory_space<vmem>>, vector<8x256xf32>
    tpu.vector_store %arg14[%c0_33, %c0_34], %39 {strides = array<i32>} : memref<8x256xf32, #tpu.memory_space<vmem>>, vector<8x256xf32>,
    return
  }
  func.func @transform_0(%arg0: i32) -> (i32, i32) {
    %c0_i32 = arith.constant 0 : i32
    %c0_i32_0 = arith.constant 0 : i32
    return %arg0, %c0_i32 : i32, i32
  }
  func.func @transform_1(%arg0: i32) -> (i32, i32) {
    %c0_i32 = arith.constant 0 : i32
    %c0_i32_0 = arith.constant 0 : i32
    %c0_i32_1 = arith.constant 0 : i32
    return %c0_i32, %c0_i32_0 : i32, i32
  }
  func.func @transform_2(%arg0: i32) -> (i32, i32) {
    %c0_i32 = arith.constant 0 : i32
    %c0_i32_0 = arith.constant 0 : i32
    %c0_i32_1 = arith.constant 0 : i32
    return %c0_i32, %c0_i32_0 : i32, i32
  }
  func.func @transform_3(%arg0: i32) -> (i32, i32) {
    %c0_i32 = arith.constant 0 : i32
    %c0_i32_0 = arith.constant 0 : i32
    %c0_i32_1 = arith.constant 0 : i32
    return %c0_i32, %c0_i32_0 : i32, i32
  }
  func.func @transform_4(%arg0: i32) -> (i32, i32) {
    %c0_i32 = arith.constant 0 : i32
    %c0_i32_0 = arith.constant 0 : i32
    %c0_i32_1 = arith.constant 0 : i32
    return %c0_i32, %c0_i32_0 : i32, i32
  }
  func.func @transform_5(%arg0: i32) -> (i32, i32) {
    %c0_i32 = arith.constant 0 : i32
    %c0_i32_0 = arith.constant 0 : i32
    %c0_i32_1 = arith.constant 0 : i32
    return %c0_i32, %c0_i32_0 : i32, i32
  }
  func.func @transform_6(%arg0: i32) -> (i32, i32) {
    %c0_i32 = arith.constant 0 : i32
    %c0_i32_0 = arith.constant 0 : i32
    %c0_i32_1 = arith.constant 0 : i32
    return %c0_i32, %c0_i32_0 : i32, i32
  }
  func.func @transform_7(%arg0: i32) -> (i32, i32) {
    %c0_i32 = arith.constant 0 : i32
    %c0_i32_0 = arith.constant 0 : i32
    %c0_i32_1 = arith.constant 0 : i32
    return %c0_i32, %c0_i32_0 : i32, i32
  }
  func.func @transform_8(%arg0: i32) -> (i32, i32) {
    %c0_i32 = arith.constant 0 : i32
    %c0_i32_0 = arith.constant 0 : i32
    %c0_i32_1 = arith.constant 0 : i32
    return %c0_i32, %c0_i32_0 : i32, i32
  }
  func.func @transform_9(%arg0: i32) -> (i32, i32) {
    %c0_i32 = arith.constant 0 : i32
    %c0_i32_0 = arith.constant 0 : i32
    %c0_i32_1 = arith.constant 0 : i32
    return %c0_i32, %c0_i32_0 : i32, i32
  }
  func.func @transform_10(%arg0: i32) -> (i32, i32) {
    %c0_i32 = arith.constant 0 : i32
    %c0_i32_0 = arith.constant 0 : i32
    %c0_i32_1 = arith.constant 0 : i32
    return %c0_i32, %c0_i32_0 : i32, i32
  }
  func.func @transform_11(%arg0: i32) -> (i32, i32) {
    %c0_i32 = arith.constant 0 : i32
    %c0_i32_0 = arith.constant 0 : i32
    %c0_i32_1 = arith.constant 0 : i32
    return %c0_i32, %c0_i32_0 : i32, i32
  }
  func.func @transform_12(%arg0: i32) -> (i32, i32) {
    %c0_i32 = arith.constant 0 : i32
    %c0_i32_0 = arith.constant 0 : i32
    return %arg0, %c0_i32 : i32, i32
  }
  func.func @transform_13(%arg0: i32) -> (i32, i32) {
    %c0_i32 = arith.constant 0 : i32
    %c0_i32_0 = arith.constant 0 : i32
    return %arg0, %c0_i32 : i32, i32
  }
}

</mosaic_0001>

<llo_original>
// kernel: teja_vae_cpd_forward.1
$region0: #{teja_vae_cpd_forward.1}
  #allocation0 [shape = 'u32[]', space=smem, size = 0x4, offset = 0x4, fixed_abs, tag = 'smem constant byte address 0x4 - core index']
  #allocation1 [shape = 'u32[144,128]{1,0:T(1,128)}', space=vmem, size = 0x12000, scoped, tag = 'internal scratch']
  %s0 = inlined_call_operand.vmem [shape: f32[8,128], index: 0, kind: input, shape index: {}]
  %s1 = inlined_call_operand.vmem [shape: f32[128,1024], index: 1, kind: input, shape index: {}]
  %s2 = inlined_call_operand.vmem [shape: f32[1,1024], index: 2, kind: input, shape index: {}]
  %s3 = inlined_call_operand.vmem [shape: f32[1024,32], index: 3, kind: input, shape index: {}]
  %s4 = inlined_call_operand.vmem [shape: f32[1,32], index: 4, kind: input, shape index: {}]
  %s5 = inlined_call_operand.vmem [shape: f32[32,128], index: 5, kind: input, shape index: {}]
  %s6 = inlined_call_operand.vmem [shape: f32[1,128], index: 6, kind: input, shape index: {}]
  %s7 = inlined_call_operand.vmem [shape: f32[128,64], index: 7, kind: input, shape index: {}]
  %s8 = inlined_call_operand.vmem [shape: f32[1,64], index: 8, kind: input, shape index: {}]
  %s9 = inlined_call_operand.vmem [shape: f32[64,6], index: 9, kind: input, shape index: {}]
  %s10 = inlined_call_operand.vmem [shape: f32[1,6], index: 10, kind: input, shape index: {}]
  %s11 = inlined_call_operand.vmem [shape: f32[6,256], index: 11, kind: input, shape index: {}]
  %s12 = inlined_call_operand.vmem [shape: f32[8,128], index: 12, kind: output, shape index: {0}]
  %s13 = inlined_call_operand.vmem [shape: f32[8,256], index: 13, kind: output, shape index: {1}]
  %14 = xla_tuple %s12, %s13
  %s15 = sld [smem:[#allocation0]]
  $region66: #{teja_vae_cpd_forward.1} parent=0
    _
  %s17 = ssub.s32 1, %s15
  %s18 = scalar_select 0, %s17, %s15
  // Predicated region
  $region2: #{teja_vae_cpd_forward.1} parent=0 // pred_check
    _
  $region3: #{teja_vae_cpd_forward.1} parent=0 // pred_check_branch
    %20 = sbr.rel (0) target = $region5
  $region4: #{teja_vae_cpd_forward.1} parent=0 // pred_region
    _
  $region5: #{teja_vae_cpd_forward.1} parent=0 // pred_fallthru
    _
  // Predicated region
  $region6: #{teja_vae_cpd_forward.1} parent=0 // pred_check
    _
  $region7: #{teja_vae_cpd_forward.1} parent=0 // pred_check_branch
    %22 = sbr.rel (0) target = $region9
  $region8: #{teja_vae_cpd_forward.1} parent=0 // pred_region
    _
  $region9: #{teja_vae_cpd_forward.1} parent=0 // pred_fallthru
    _
  // Predicated region
  $region10: #{teja_vae_cpd_forward.1} parent=0 // pred_check
    _
  $region11: #{teja_vae_cpd_forward.1} parent=0 // pred_check_branch
    %24 = sbr.rel (0) target = $region13
  $region12: #{teja_vae_cpd_forward.1} parent=0 // pred_region
    _
  $region13: #{teja_vae_cpd_forward.1} parent=0 // pred_fallthru
    _
  // Predicated region
  $region14: #{teja_vae_cpd_forward.1} parent=0 // pred_check
    _
  $region15: #{teja_vae_cpd_forward.1} parent=0 // pred_check_branch
    %26 = sbr.rel (0) target = $region17
  $region16: #{teja_vae_cpd_forward.1} parent=0 // pred_region
    _
  $region17: #{teja_vae_cpd_forward.1} parent=0 // pred_fallthru
    _
  // Predicated region
  $region18: #{teja_vae_cpd_forward.1} parent=0 // pred_check
    _
  $region19: #{teja_vae_cpd_forward.1} parent=0 // pred_check_branch
    %28 = sbr.rel (0) target = $region21
  $region20: #{teja_vae_cpd_forward.1} parent=0 // pred_region
    _
  $region21: #{teja_vae_cpd_forward.1} parent=0 // pred_fallthru
    _
  // Predicated region
  $region22: #{teja_vae_cpd_forward.1} parent=0 // pred_check
    _
  $region23: #{teja_vae_cpd_forward.1} parent=0 // pred_check_branch
    %30 = sbr.rel (0) target = $region25
  $region24: #{teja_vae_cpd_forward.1} parent=0 // pred_region
    _
  $region25: #{teja_vae_cpd_forward.1} parent=0 // pred_fallthru
    _
  // Predicated region
  $region26: #{teja_vae_cpd_forward.1} parent=0 // pred_check
    _
  $region27: #{teja_vae_cpd_forward.1} parent=0 // pred_check_branch
    %32 = sbr.rel (0) target = $region29
  $region28: #{teja_vae_cpd_forward.1} parent=0 // pred_region
    _
  $region29: #{teja_vae_cpd_forward.1} parent=0 // pred_fallthru
    _
  // Predicated region
  $region30: #{teja_vae_cpd_forward.1} parent=0 // pred_check
    _
  $region31: #{teja_vae_cpd_forward.1} parent=0 // pred_check_branch
    %34 = sbr.rel (0) target = $region33
  $region32: #{teja_vae_cpd_forward.1} parent=0 // pred_region
    _
  $region33: #{teja_vae_cpd_forward.1} parent=0 // pred_fallthru
    _
  // Predicated region
  $region34: #{teja_vae_cpd_forward.1} parent=0 // pred_check
    _
  $region35: #{teja_vae_cpd_forward.1} parent=0 // pred_check_branch
    %36 = sbr.rel (0) target = $region37
  $region36: #{teja_vae_cpd_forward.1} parent=0 // pred_region
    _
  $region37: #{teja_vae_cpd_forward.1} parent=0 // pred_fallthru
    _
  // Predicated region
  $region38: #{teja_vae_cpd_forward.1} parent=0 // pred_check
    _
  $region39: #{teja_vae_cpd_forward.1} parent=0 // pred_check_branch
    %38 = sbr.rel (0) target = $region41
  $region40: #{teja_vae_cpd_forward.1} parent=0 // pred_region
    _
  $region41: #{teja_vae_cpd_forward.1} parent=0 // pred_fallthru
    _
  // Predicated region
  $region42: #{teja_vae_cpd_forward.1} parent=0 // pred_check
    _
  $region43: #{teja_vae_cpd_forward.1} parent=0 // pred_check_branch
    %40 = sbr.rel (0) target = $region45
  $region44: #{teja_vae_cpd_forward.1} parent=0 // pred_region
    _
  $region45: #{teja_vae_cpd_forward.1} parent=0 // pred_fallthru
    _
  // Predicated region
  $region46: #{teja_vae_cpd_forward.1} parent=0 // pred_check
    _
  $region47: #{teja_vae_cpd_forward.1} parent=0 // pred_check_branch
    %42 = sbr.rel (0) target = $region49
  $region48: #{teja_vae_cpd_forward.1} parent=0 // pred_region
    _
  $region49: #{teja_vae_cpd_forward.1} parent=0 // pred_fallthru
    _
  %v43 = vld [vmem:[%s0] sm:$0xff]
  %v44 = vld [vmem:[%s1] sm:$0xff]
  %v45 = vld [vmem:[%s1 + $0x8] sm:$0xff]
  %v46 = vld [vmem:[%s1 + $0x10] sm:$0xff]
  %v47 = vld [vmem:[%s1 + $0x18] sm:$0xff]
  %v48 = vld [vmem:[%s1 + $0x20] sm:$0xff]
  %v49 = vld [vmem:[%s1 + $0x28] sm:$0xff]
  %v50 = vld [vmem:[%s1 + $0x30] sm:$0xff]
  %v51 = vld [vmem:[%s1 + $0x38] sm:$0xff]
  %v52 = vld [vmem:[%s1 + $0x40] sm:$0xff]
  %v53 = vld [vmem:[%s1 + $0x48] sm:$0xff]
  %v54 = vld [vmem:[%s1 + $0x50] sm:$0xff]
  %v55 = vld [vmem:[%s1 + $0x58] sm:$0xff]
  %v56 = vld [vmem:[%s1 + $0x60] sm:$0xff]
  %v57 = vld [vmem:[%s1 + $0x68] sm:$0xff]
  %v58 = vld [vmem:[%s1 + $0x70] sm:$0xff]
  %v59 = vld [vmem:[%s1 + $0x78] sm:$0xff]
  %v60 = vld [vmem:[%s1 + $0x80] sm:$0xff]
  %v61 = vld [vmem:[%s1 + $0x88] sm:$0xff]
  %v62 = vld [vmem:[%s1 + $0x90] sm:$0xff]
  %v63 = vld [vmem:[%s1 + $0x98] sm:$0xff]
  %v64 = vld [vmem:[%s1 + $0xa0] sm:$0xff]
  %v65 = vld [vmem:[%s1 + $0xa8] sm:$0xff]
  %v66 = vld [vmem:[%s1 + $0xb0] sm:$0xff]
  %v67 = vld [vmem:[%s1 + $0xb8] sm:$0xff]
  %v68 = vld [vmem:[%s1 + $0xc0] sm:$0xff]
  %v69 = vld [vmem:[%s1 + $0xc8] sm:$0xff]
  %v70 = vld [vmem:[%s1 + $0xd0] sm:$0xff]
  %v71 = vld [vmem:[%s1 + $0xd8] sm:$0xff]
  %v72 = vld [vmem:[%s1 + $0xe0] sm:$0xff]
  %v73 = vld [vmem:[%s1 + $0xe8] sm:$0xff]
  %v74 = vld [vmem:[%s1 + $0xf0] sm:$0xff]
  %v75 = vld [vmem:[%s1 + $0xf8] sm:$0xff]
  %v76 = vld [vmem:[%s1 + $0x100] sm:$0xff]
  %v77 = vld [vmem:[%s1 + $0x108] sm:$0xff]
  %v78 = vld [vmem:[%s1 + $0x110] sm:$0xff]
  %v79 = vld [vmem:[%s1 + $0x118] sm:$0xff]
  %v80 = vld [vmem:[%s1 + $0x120] sm:$0xff]
  %v81 = vld [vmem:[%s1 + $0x128] sm:$0xff]
  %v82 = vld [vmem:[%s1 + $0x130] sm:$0xff]
  %v83 = vld [vmem:[%s1 + $0x138] sm:$0xff]
  %v84 = vld [vmem:[%s1 + $0x140] sm:$0xff]
  %v85 = vld [vmem:[%s1 + $0x148] sm:$0xff]
  %v86 = vld [vmem:[%s1 + $0x150] sm:$0xff]
  %v87 = vld [vmem:[%s1 + $0x158] sm:$0xff]
  %v88 = vld [vmem:[%s1 + $0x160] sm:$0xff]
  %v89 = vld [vmem:[%s1 + $0x168] sm:$0xff]
  %v90 = vld [vmem:[%s1 + $0x170] sm:$0xff]
  %v91 = vld [vmem:[%s1 + $0x178] sm:$0xff]
  %v92 = vld [vmem:[%s1 + $0x180] sm:$0xff]
  %v93 = vld [vmem:[%s1 + $0x188] sm:$0xff]
  %v94 = vld [vmem:[%s1 + $0x190] sm:$0xff]
  %v95 = vld [vmem:[%s1 + $0x198] sm:$0xff]
  %v96 = vld [vmem:[%s1 + $0x1a0] sm:$0xff]
  %v97 = vld [vmem:[%s1 + $0x1a8] sm:$0xff]
  %v98 = vld [vmem:[%s1 + $0x1b0] sm:$0xff]
  %v99 = vld [vmem:[%s1 + $0x1b8] sm:$0xff]
  %v100 = vld [vmem:[%s1 + $0x1c0] sm:$0xff]
  %v101 = vld [vmem:[%s1 + $0x1c8] sm:$0xff]
  %v102 = vld [vmem:[%s1 + $0x1d0] sm:$0xff]
  %v103 = vld [vmem:[%s1 + $0x1d8] sm:$0xff]
  %v104 = vld [vmem:[%s1 + $0x1e0] sm:$0xff]
  %v105 = vld [vmem:[%s1 + $0x1e8] sm:$0xff]
  %v106 = vld [vmem:[%s1 + $0x1f0] sm:$0xff]
  %v107 = vld [vmem:[%s1 + $0x1f8] sm:$0xff]
  %v108 = vld [vmem:[%s1 + $0x200] sm:$0xff]
  %v109 = vld [vmem:[%s1 + $0x208] sm:$0xff]
  %v110 = vld [vmem:[%s1 + $0x210] sm:$0xff]
  %v111 = vld [vmem:[%s1 + $0x218] sm:$0xff]
  %v112 = vld [vmem:[%s1 + $0x220] sm:$0xff]
  %v113 = vld [vmem:[%s1 + $0x228] sm:$0xff]
  %v114 = vld [vmem:[%s1 + $0x230] sm:$0xff]
  %v115 = vld [vmem:[%s1 + $0x238] sm:$0xff]
  %v116 = vld [vmem:[%s1 + $0x240] sm:$0xff]
  %v117 = vld [vmem:[%s1 + $0x248] sm:$0xff]
  %v118 = vld [vmem:[%s1 + $0x250] sm:$0xff]
  %v119 = vld [vmem:[%s1 + $0x258] sm:$0xff]
  %v120 = vld [vmem:[%s1 + $0x260] sm:$0xff]
  %v121 = vld [vmem:[%s1 + $0x268] sm:$0xff]
  %v122 = vld [vmem:[%s1 + $0x270] sm:$0xff]
  %v123 = vld [vmem:[%s1 + $0x278] sm:$0xff]
  %v124 = vld [vmem:[%s1 + $0x280] sm:$0xff]
  %v125 = vld [vmem:[%s1 + $0x288] sm:$0xff]
  %v126 = vld [vmem:[%s1 + $0x290] sm:$0xff]
  %v127 = vld [vmem:[%s1 + $0x298] sm:$0xff]
  %v128 = vld [vmem:[%s1 + $0x2a0] sm:$0xff]
  %v129 = vld [vmem:[%s1 + $0x2a8] sm:$0xff]
  %v130 = vld [vmem:[%s1 + $0x2b0] sm:$0xff]
  %v131 = vld [vmem:[%s1 + $0x2b8] sm:$0xff]
  %v132 = vld [vmem:[%s1 + $0x2c0] sm:$0xff]
  %v133 = vld [vmem:[%s1 + $0x2c8] sm:$0xff]
  %v134 = vld [vmem:[%s1 + $0x2d0] sm:$0xff]
  %v135 = vld [vmem:[%s1 + $0x2d8] sm:$0xff]
  %v136 = vld [vmem:[%s1 + $0x2e0] sm:$0xff]
  %v137 = vld [vmem:[%s1 + $0x2e8] sm:$0xff]
  %v138 = vld [vmem:[%s1 + $0x2f0] sm:$0xff]
  %v139 = vld [vmem:[%s1 + $0x2f8] sm:$0xff]
  %v140 = vld [vmem:[%s1 + $0x300] sm:$0xff]
  %v141 = vld [vmem:[%s1 + $0x308] sm:$0xff]
  %v142 = vld [vmem:[%s1 + $0x310] sm:$0xff]
  %v143 = vld [vmem:[%s1 + $0x318] sm:$0xff]
  %v144 = vld [vmem:[%s1 + $0x320] sm:$0xff]
  %v145 = vld [vmem:[%s1 + $0x328] sm:$0xff]
  %v146 = vld [vmem:[%s1 + $0x330] sm:$0xff]
  %v147 = vld [vmem:[%s1 + $0x338] sm:$0xff]
  %v148 = vld [vmem:[%s1 + $0x340] sm:$0xff]
  %v149 = vld [vmem:[%s1 + $0x348] sm:$0xff]
  %v150 = vld [vmem:[%s1 + $0x350] sm:$0xff]
  %v151 = vld [vmem:[%s1 + $0x358] sm:$0xff]
  %v152 = vld [vmem:[%s1 + $0x360] sm:$0xff]
  %v153 = vld [vmem:[%s1 + $0x368] sm:$0xff]
  %v154 = vld [vmem:[%s1 + $0x370] sm:$0xff]
  %v155 = vld [vmem:[%s1 + $0x378] sm:$0xff]
  %v156 = vld [vmem:[%s1 + $0x380] sm:$0xff]
  %v157 = vld [vmem:[%s1 + $0x388] sm:$0xff]
  %v158 = vld [vmem:[%s1 + $0x390] sm:$0xff]
  %v159 = vld [vmem:[%s1 + $0x398] sm:$0xff]
  %v160 = vld [vmem:[%s1 + $0x3a0] sm:$0xff]
  %v161 = vld [vmem:[%s1 + $0x3a8] sm:$0xff]
  %v162 = vld [vmem:[%s1 + $0x3b0] sm:$0xff]
  %v163 = vld [vmem:[%s1 + $0x3b8] sm:$0xff]
  %v164 = vld [vmem:[%s1 + $0x3c0] sm:$0xff]
  %v165 = vld [vmem:[%s1 + $0x3c8] sm:$0xff]
  %v166 = vld [vmem:[%s1 + $0x3d0] sm:$0xff]
  %v167 = vld [vmem:[%s1 + $0x3d8] sm:$0xff]
  %v168 = vld [vmem:[%s1 + $0x3e0] sm:$0xff]
  %v169 = vld [vmem:[%s1 + $0x3e8] sm:$0xff]
  %v170 = vld [vmem:[%s1 + $0x3f0] sm:$0xff]
  %v171 = vld [vmem:[%s1 + $0x3f8] sm:$0xff]
  %v172 = vld [vmem:[%s2] sm:$0xff]
  %v174 = vlaneseq
  %v175 = vshrl.u32 %v174, 7
  %v176 = vsub.s32 0, %v175
  %v177 = vrot.slane %v172, %v176
  %v178 = vlaneseq
  %v179 = vshrl.u32 %v178, 7
  %v180 = vsub.s32 1, %v179
  %v181 = vrot.slane %v172, %v180
  %v182 = vlaneseq
  %v183 = vshrl.u32 %v182, 7
  %v184 = vsub.s32 2, %v183
  %v185 = vrot.slane %v172, %v184
  %v186 = vlaneseq
  %v187 = vshrl.u32 %v186, 7
  %v188 = vsub.s32 3, %v187
  %v189 = vrot.slane %v172, %v188
  %v190 = vlaneseq
  %v191 = vshrl.u32 %v190, 7
  %v192 = vsub.s32 4, %v191
  %v193 = vrot.slane %v172, %v192
  %v194 = vlaneseq
  %v195 = vshrl.u32 %v194, 7
  %v196 = vsub.s32 5, %v195
  %v197 = vrot.slane %v172, %v196
  %v198 = vlaneseq
  %v199 = vshrl.u32 %v198, 7
  %v200 = vsub.s32 6, %v199
  %v201 = vrot.slane %v172, %v200
  %v202 = vlaneseq
  %v203 = vshrl.u32 %v202, 7
  %v204 = vsub.s32 7, %v203
  %v205 = vrot.slane %v172, %v204
  %214 = vmatprep.subr.mxu0 %v45
  %215 = vmatpush1.msra.mxu0 %v44
  %216 = vmatprep.subr.mxu0 %v53
  %217 = vmatpush1.msra.mxu0 %v52
  %218 = vmatprep.subr.mxu0 %v61
  %219 = vmatpush1.msra.mxu0 %v60
  %220 = vmatprep.subr.mxu0 %v69
  %221 = vmatpush1.msra.mxu0 %v68
  %222 = vmatprep.subr.mxu0 %v77
  %223 = vmatpush1.msra.mxu0 %v76
  %224 = vmatprep.subr.mxu0 %v85
  %225 = vmatpush1.msra.mxu0 %v84
  %226 = vmatprep.subr.mxu0 %v93
  %227 = vmatpush1.msra.mxu0 %v92
  %228 = vmatprep.subr.mxu0 %v101
  %229 = vmatpush1.msra.mxu0 %v100
  %230 = vmatprep.subr.mxu0 %v109
  %231 = vmatpush1.msra.mxu0 %v108
  %232 = vmatprep.subr.mxu0 %v117
  %233 = vmatpush1.msra.mxu0 %v116
  %234 = vmatprep.subr.mxu0 %v125
  %235 = vmatpush1.msra.mxu0 %v124
  %236 = vmatprep.subr.mxu0 %v133
  %237 = vmatpush1.msra.mxu0 %v132
  %238 = vmatprep.subr.mxu0 %v141
  %239 = vmatpush1.msra.mxu0 %v140
  %240 = vmatprep.subr.mxu0 %v149
  %241 = vmatpush1.msra.mxu0 %v148
  %242 = vmatprep.subr.mxu0 %v157
  %243 = vmatpush1.msra.mxu0 %v156
  %244 = vmatprep.subr.mxu0 %v165
  %245 = vmatpush1.msra.mxu0 %v164
  %246 = vmatprep.subr.mxu0 0.0
  %247 = vmatpush1.msra.mxu0 0.0
  %248 = vmatprep.subr.mxu0 0.0
  %249 = vmatpush1.msra.mxu0 0.0
  %250 = vmatprep.subr.mxu0 0.0
  %251 = vmatpush1.msra.mxu0 0.0
  %252 = vmatprep.subr.mxu0 0.0
  %253 = vmatpush1.msra.mxu0 0.0
  %254 = vmatprep.subr.mxu0 0.0
  %255 = vmatpush1.msra.mxu0 0.0
  %256 = vmatprep.subr.mxu0 0.0
  %257 = vmatpush1.msra.mxu0 0.0
  %258 = vmatprep.subr.mxu0 0.0
  %259 = vmatpush1.msra.mxu0 0.0
  %260 = vmatprep.subr.mxu0 0.0
  %261 = vmatpush1.msra.mxu0 0.0
  %262 = vmatprep.subr.mxu0 0.0
  %263 = vmatpush1.msra.mxu0 0.0
  %264 = vmatprep.subr.mxu0 0.0
  %265 = vmatpush1.msra.mxu0 0.0
  %266 = vmatprep.subr.mxu0 0.0
  %267 = vmatpush1.msra.mxu0 0.0
  %268 = vmatprep.subr.mxu0 0.0
  %269 = vmatpush1.msra.mxu0 0.0
  %270 = vmatprep.subr.mxu0 0.0
  %271 = vmatpush1.msra.mxu0 0.0
  %272 = vmatprep.subr.mxu0 0.0
  %273 = vmatpush1.msra.mxu0 0.0
  %274 = vmatprep.subr.mxu0 0.0
  %275 = vmatpush1.msra.mxu0 0.0
  %276 = vmatprep.subr.mxu0 0.0
  %277 = vmatpush1.msra.mxu0 0.0
  %278 = vmatprep.mubr.f32.mxu0 0.0
  %279 = vmatmul.mubr.f32.gmra.mrb[0].mxu0 %v43
  %v280 = vpop.f32.mrb[0].mxu0
  %v281 = vadd.f32 %v177, %v280
  %v282 = vpop.f32.mrb[0].mxu0
  %v283 = vadd.f32 %v181, %v282
  %284 = vdwg.mxu0
  %285 = vmatprep.subr.mxu0 %v47
  %286 = vmatpush1.msra.mxu0 %v46
  %287 = vmatprep.subr.mxu0 %v55
  %288 = vmatpush1.msra.mxu0 %v54
  %289 = vmatprep.subr.mxu0 %v63
  %290 = vmatpush1.msra.mxu0 %v62
  %291 = vmatprep.subr.mxu0 %v71
  %292 = vmatpush1.msra.mxu0 %v70
  %293 = vmatprep.subr.mxu0 %v79
  %294 = vmatpush1.msra.mxu0 %v78
  %295 = vmatprep.subr.mxu0 %v87
  %296 = vmatpush1.msra.mxu0 %v86
  %297 = vmatprep.subr.mxu0 %v95
  %298 = vmatpush1.msra.mxu0 %v94
  %299 = vmatprep.subr.mxu0 %v103
  %300 = vmatpush1.msra.mxu0 %v102
  %301 = vmatprep.subr.mxu0 %v111
  %302 = vmatpush1.msra.mxu0 %v110
  %303 = vmatprep.subr.mxu0 %v119
  %304 = vmatpush1.msra.mxu0 %v118
  %305 = vmatprep.subr.mxu0 %v127
  %306 = vmatpush1.msra.mxu0 %v126
  %307 = vmatprep.subr.mxu0 %v135
  %308 = vmatpush1.msra.mxu0 %v134
  %309 = vmatprep.subr.mxu0 %v143
  %310 = vmatpush1.msra.mxu0 %v142
  %311 = vmatprep.subr.mxu0 %v151
  %312 = vmatpush1.msra.mxu0 %v150
  %313 = vmatprep.subr.mxu0 %v159
  %314 = vmatpush1.msra.mxu0 %v158
  %315 = vmatprep.subr.mxu0 %v167
  %316 = vmatpush1.msra.mxu0 %v166
  %317 = vmatprep.subr.mxu0 0.0
  %318 = vmatpush1.msra.mxu0 0.0
  %319 = vmatprep.subr.mxu0 0.0
  %320 = vmatpush1.msra.mxu0 0.0
  %321 = vmatprep.subr.mxu0 0.0
  %322 = vmatpush1.msra.mxu0 0.0
  %323 = vmatprep.subr.mxu0 0.0
  %324 = vmatpush1.msra.mxu0 0.0
  %325 = vmatprep.subr.mxu0 0.0
  %326 = vmatpush1.msra.mxu0 0.0
  %327 = vmatprep.subr.mxu0 0.0
  %328 = vmatpush1.msra.mxu0 0.0
  %329 = vmatprep.subr.mxu0 0.0
  %330 = vmatpush1.msra.mxu0 0.0
  %331 = vmatprep.subr.mxu0 0.0
  %332 = vmatpush1.msra.mxu0 0.0
  %333 = vmatprep.subr.mxu0 0.0
  %334 = vmatpush1.msra.mxu0 0.0
  %335 = vmatprep.subr.mxu0 0.0
  %336 = vmatpush1.msra.mxu0 0.0
  %337 = vmatprep.subr.mxu0 0.0
  %338 = vmatpush1.msra.mxu0 0.0
  %339 = vmatprep.subr.mxu0 0.0
  %340 = vmatpush1.msra.mxu0 0.0
  %341 = vmatprep.subr.mxu0 0.0
  %342 = vmatpush1.msra.mxu0 0.0
  %343 = vmatprep.subr.mxu0 0.0
  %344 = vmatpush1.msra.mxu0 0.0
  %345 = vmatprep.subr.mxu0 0.0
  %346 = vmatpush1.msra.mxu0 0.0
  %347 = vmatprep.subr.mxu0 0.0
  %348 = vmatpush1.msra.mxu0 0.0
  %349 = vmatprep.mubr.f32.mxu0 0.0
  %350 = vmatmul.mubr.f32.gmra.mrb[0].mxu0 %v43
  %v351 = vpop.f32.mrb[0].mxu0
  %v352 = vadd.f32 %v185, %v351
  %v353 = vpop.f32.mrb[0].mxu0
  %v354 = vadd.f32 %v189, %v353
  %355 = vdwg.mxu0
  %356 = vmatprep.subr.mxu0 %v49
  %357 = vmatpush1.msra.mxu0 %v48
  %358 = vmatprep.subr.mxu0 %v57
  %359 = vmatpush1.msra.mxu0 %v56
  %360 = vmatprep.subr.mxu0 %v65
  %361 = vmatpush1.msra.mxu0 %v64
  %362 = vmatprep.subr.mxu0 %v73
  %363 = vmatpush1.msra.mxu0 %v72
  %364 = vmatprep.subr.mxu0 %v81
  %365 = vmatpush1.msra.mxu0 %v80
  %366 = vmatprep.subr.mxu0 %v89
  %367 = vmatpush1.msra.mxu0 %v88
  %368 = vmatprep.subr.mxu0 %v97
  %369 = vmatpush1.msra.mxu0 %v96
  %370 = vmatprep.subr.mxu0 %v105
  %371 = vmatpush1.msra.mxu0 %v104
  %372 = vmatprep.subr.mxu0 %v113
  %373 = vmatpush1.msra.mxu0 %v112
  %374 = vmatprep.subr.mxu0 %v121
  %375 = vmatpush1.msra.mxu0 %v120
  %376 = vmatprep.subr.mxu0 %v129
  %377 = vmatpush1.msra.mxu0 %v128
  %378 = vmatprep.subr.mxu0 %v137
  %379 = vmatpush1.msra.mxu0 %v136
  %380 = vmatprep.subr.mxu0 %v145
  %381 = vmatpush1.msra.mxu0 %v144
  %382 = vmatprep.subr.mxu0 %v153
  %383 = vmatpush1.msra.mxu0 %v152
  %384 = vmatprep.subr.mxu0 %v161
  %385 = vmatpush1.msra.mxu0 %v160
  %386 = vmatprep.subr.mxu0 %v169
  %387 = vmatpush1.msra.mxu0 %v168
  %388 = vmatprep.subr.mxu0 0.0
  %389 = vmatpush1.msra.mxu0 0.0
  %390 = vmatprep.subr.mxu0 0.0
  %391 = vmatpush1.msra.mxu0 0.0
  %392 = vmatprep.subr.mxu0 0.0
  %393 = vmatpush1.msra.mxu0 0.0
  %394 = vmatprep.subr.mxu0 0.0
  %395 = vmatpush1.msra.mxu0 0.0
  %396 = vmatprep.subr.mxu0 0.0
  %397 = vmatpush1.msra.mxu0 0.0
  %398 = vmatprep.subr.mxu0 0.0
  %399 = vmatpush1.msra.mxu0 0.0
  %400 = vmatprep.subr.mxu0 0.0
  %401 = vmatpush1.msra.mxu0 0.0
  %402 = vmatprep.subr.mxu0 0.0
  %403 = vmatpush1.msra.mxu0 0.0
  %404 = vmatprep.subr.mxu0 0.0
  %405 = vmatpush1.msra.mxu0 0.0
  %406 = vmatprep.subr.mxu0 0.0
  %407 = vmatpush1.msra.mxu0 0.0
  %408 = vmatprep.subr.mxu0 0.0
  %409 = vmatpush1.msra.mxu0 0.0
  %410 = vmatprep.subr.mxu0 0.0
  %411 = vmatpush1.msra.mxu0 0.0
  %412 = vmatprep.subr.mxu0 0.0
  %413 = vmatpush1.msra.mxu0 0.0
  %414 = vmatprep.subr.mxu0 0.0
  %415 = vmatpush1.msra.mxu0 0.0
  %416 = vmatprep.subr.mxu0 0.0
  %417 = vmatpush1.msra.mxu0 0.0
  %418 = vmatprep.subr.mxu0 0.0
  %419 = vmatpush1.msra.mxu0 0.0
  %420 = vmatprep.mubr.f32.mxu0 0.0
  %421 = vmatmul.mubr.f32.gmra.mrb[0].mxu0 %v43
  %v422 = vpop.f32.mrb[0].mxu0
  %v423 = vadd.f32 %v193, %v422
  %v424 = vpop.f32.mrb[0].mxu0
  %v425 = vadd.f32 %v197, %v424
  %426 = vdwg.mxu0
  %427 = vmatprep.subr.mxu0 %v51
  %428 = vmatpush1.msra.mxu0 %v50
  %429 = vmatprep.subr.mxu0 %v59
  %430 = vmatpush1.msra.mxu0 %v58
  %431 = vmatprep.subr.mxu0 %v67
  %432 = vmatpush1.msra.mxu0 %v66
  %433 = vmatprep.subr.mxu0 %v75
  %434 = vmatpush1.msra.mxu0 %v74
  %435 = vmatprep.subr.mxu0 %v83
  %436 = vmatpush1.msra.mxu0 %v82
  %437 = vmatprep.subr.mxu0 %v91
  %438 = vmatpush1.msra.mxu0 %v90
  %439 = vmatprep.subr.mxu0 %v99
  %440 = vmatpush1.msra.mxu0 %v98
  %441 = vmatprep.subr.mxu0 %v107
  %442 = vmatpush1.msra.mxu0 %v106
  %443 = vmatprep.subr.mxu0 %v115
  %444 = vmatpush1.msra.mxu0 %v114
  %445 = vmatprep.subr.mxu0 %v123
  %446 = vmatpush1.msra.mxu0 %v122
  %447 = vmatprep.subr.mxu0 %v131
  %448 = vmatpush1.msra.mxu0 %v130
  %449 = vmatprep.subr.mxu0 %v139
  %450 = vmatpush1.msra.mxu0 %v138
  %451 = vmatprep.subr.mxu0 %v147
  %452 = vmatpush1.msra.mxu0 %v146
  %453 = vmatprep.subr.mxu0 %v155
  %454 = vmatpush1.msra.mxu0 %v154
  %455 = vmatprep.subr.mxu0 %v163
  %456 = vmatpush1.msra.mxu0 %v162
  %457 = vmatprep.subr.mxu0 %v171
  %458 = vmatpush1.msra.mxu0 %v170
  %459 = vmatprep.subr.mxu0 0.0
  %460 = vmatpush1.msra.mxu0 0.0
  %461 = vmatprep.subr.mxu0 0.0
  %462 = vmatpush1.msra.mxu0 0.0
  %463 = vmatprep.subr.mxu0 0.0
  %464 = vmatpush1.msra.mxu0 0.0
  %465 = vmatprep.subr.mxu0 0.0
  %466 = vmatpush1.msra.mxu0 0.0
  %467 = vmatprep.subr.mxu0 0.0
  %468 = vmatpush1.msra.mxu0 0.0
  %469 = vmatprep.subr.mxu0 0.0
  %470 = vmatpush1.msra.mxu0 0.0
  %471 = vmatprep.subr.mxu0 0.0
  %472 = vmatpush1.msra.mxu0 0.0
  %473 = vmatprep.subr.mxu0 0.0
  %474 = vmatpush1.msra.mxu0 0.0
  %475 = vmatprep.subr.mxu0 0.0
  %476 = vmatpush1.msra.mxu0 0.0
  %477 = vmatprep.subr.mxu0 0.0
  %478 = vmatpush1.msra.mxu0 0.0
  %479 = vmatprep.subr.mxu0 0.0
  %480 = vmatpush1.msra.mxu0 0.0
  %481 = vmatprep.subr.mxu0 0.0
  %482 = vmatpush1.msra.mxu0 0.0
  %483 = vmatprep.subr.mxu0 0.0
  %484 = vmatpush1.msra.mxu0 0.0
  %485 = vmatprep.subr.mxu0 0.0
  %486 = vmatpush1.msra.mxu0 0.0
  %487 = vmatprep.subr.mxu0 0.0
  %488 = vmatpush1.msra.mxu0 0.0
  %489 = vmatprep.subr.mxu0 0.0
  %490 = vmatpush1.msra.mxu0 0.0
  %491 = vmatprep.mubr.f32.mxu0 0.0
  %492 = vmatmul.mubr.f32.gmra.mrb[0].mxu0 %v43
  %v493 = vpop.f32.mrb[0].mxu0
  %v494 = vadd.f32 %v201, %v493
  %v495 = vpop.f32.mrb[0].mxu0
  %v496 = vadd.f32 %v205, %v495
  %497 = vdwg.mxu0
  %v498 = vmax.f32 %v281, 0.0
  %v499 = vmax.f32 %v283, 0.0
  %v500 = vmax.f32 %v352, 0.0
  %v501 = vmax.f32 %v354, 0.0
  %v502 = vmax.f32 %v423, 0.0
  %v503 = vmax.f32 %v425, 0.0
  %v504 = vmax.f32 %v494, 0.0
  %v505 = vmax.f32 %v496, 0.0
  %v506 = vld [vmem:[%s3] sm:$0xff]
  %v507 = vld [vmem:[%s3 + $0x8] sm:$0xff]
  %v508 = vld [vmem:[%s3 + $0x10] sm:$0xff]
  %v509 = vld [vmem:[%s3 + $0x18] sm:$0xff]
  %v510 = vld [vmem:[%s3 + $0x20] sm:$0xff]
  %v511 = vld [vmem:[%s3 + $0x28] sm:$0xff]
  %v512 = vld [vmem:[%s3 + $0x30] sm:$0xff]
  %v513 = vld [vmem:[%s3 + $0x38] sm:$0xff]
  %v514 = vld [vmem:[%s3 + $0x40] sm:$0xff]
  %v515 = vld [vmem:[%s3 + $0x48] sm:$0xff]
  %v516 = vld [vmem:[%s3 + $0x50] sm:$0xff]
  %v517 = vld [vmem:[%s3 + $0x58] sm:$0xff]
  %v518 = vld [vmem:[%s3 + $0x60] sm:$0xff]
  %v519 = vld [vmem:[%s3 + $0x68] sm:$0xff]
  %v520 = vld [vmem:[%s3 + $0x70] sm:$0xff]
  %v521 = vld [vmem:[%s3 + $0x78] sm:$0xff]
  %v522 = vld [vmem:[%s3 + $0x80] sm:$0xff]
  %v523 = vld [vmem:[%s3 + $0x88] sm:$0xff]
  %v524 = vld [vmem:[%s3 + $0x90] sm:$0xff]
  %v525 = vld [vmem:[%s3 + $0x98] sm:$0xff]
  %v526 = vld [vmem:[%s3 + $0xa0] sm:$0xff]
  %v527 = vld [vmem:[%s3 + $0xa8] sm:$0xff]
  %v528 = vld [vmem:[%s3 + $0xb0] sm:$0xff]
  %v529 = vld [vmem:[%s3 + $0xb8] sm:$0xff]
  %v530 = vld [vmem:[%s3 + $0xc0] sm:$0xff]
  %v531 = vld [vmem:[%s3 + $0xc8] sm:$0xff]
  %v532 = vld [vmem:[%s3 + $0xd0] sm:$0xff]
  %v533 = vld [vmem:[%s3 + $0xd8] sm:$0xff]
  %v534 = vld [vmem:[%s3 + $0xe0] sm:$0xff]
  %v535 = vld [vmem:[%s3 + $0xe8] sm:$0xff]
  %v536 = vld [vmem:[%s3 + $0xf0] sm:$0xff]
  %v537 = vld [vmem:[%s3 + $0xf8] sm:$0xff]
  %v538 = vld [vmem:[%s3 + $0x100] sm:$0xff]
  %v539 = vld [vmem:[%s3 + $0x108] sm:$0xff]
  %v540 = vld [vmem:[%s3 + $0x110] sm:$0xff]
  %v541 = vld [vmem:[%s3 + $0x118] sm:$0xff]
  %v542 = vld [vmem:[%s3 + $0x120] sm:$0xff]
  %v543 = vld [vmem:[%s3 + $0x128] sm:$0xff]
  %v544 = vld [vmem:[%s3 + $0x130] sm:$0xff]
  %v545 = vld [vmem:[%s3 + $0x138] sm:$0xff]
  %v546 = vld [vmem:[%s3 + $0x140] sm:$0xff]
  %v547 = vld [vmem:[%s3 + $0x148] sm:$0xff]
  %v548 = vld [vmem:[%s3 + $0x150] sm:$0xff]
  %v549 = vld [vmem:[%s3 + $0x158] sm:$0xff]
  %v550 = vld [vmem:[%s3 + $0x160] sm:$0xff]
  %v551 = vld [vmem:[%s3 + $0x168] sm:$0xff]
  %v552 = vld [vmem:[%s3 + $0x170] sm:$0xff]
  %v553 = vld [vmem:[%s3 + $0x178] sm:$0xff]
  %v554 = vld [vmem:[%s3 + $0x180] sm:$0xff]
  %v555 = vld [vmem:[%s3 + $0x188] sm:$0xff]
  %v556 = vld [vmem:[%s3 + $0x190] sm:$0xff]
  %v557 = vld [vmem:[%s3 + $0x198] sm:$0xff]
  %v558 = vld [vmem:[%s3 + $0x1a0] sm:$0xff]
  %v559 = vld [vmem:[%s3 + $0x1a8] sm:$0xff]
  %v560 = vld [vmem:[%s3 + $0x1b0] sm:$0xff]
  %v561 = vld [vmem:[%s3 + $0x1b8] sm:$0xff]
  %v562 = vld [vmem:[%s3 + $0x1c0] sm:$0xff]
  %v563 = vld [vmem:[%s3 + $0x1c8] sm:$0xff]
  %v564 = vld [vmem:[%s3 + $0x1d0] sm:$0xff]
  %v565 = vld [vmem:[%s3 + $0x1d8] sm:$0xff]
  %v566 = vld [vmem:[%s3 + $0x1e0] sm:$0xff]
  %v567 = vld [vmem:[%s3 + $0x1e8] sm:$0xff]
  %v568 = vld [vmem:[%s3 + $0x1f0] sm:$0xff]
  %v569 = vld [vmem:[%s3 + $0x1f8] sm:$0xff]
  %v570 = vld [vmem:[%s3 + $0x200] sm:$0xff]
  %v571 = vld [vmem:[%s3 + $0x208] sm:$0xff]
  %v572 = vld [vmem:[%s3 + $0x210] sm:$0xff]
  %v573 = vld [vmem:[%s3 + $0x218] sm:$0xff]
  %v574 = vld [vmem:[%s3 + $0x220] sm:$0xff]
  %v575 = vld [vmem:[%s3 + $0x228] sm:$0xff]
  %v576 = vld [vmem:[%s3 + $0x230] sm:$0xff]
  %v577 = vld [vmem:[%s3 + $0x238] sm:$0xff]
  %v578 = vld [vmem:[%s3 + $0x240] sm:$0xff]
  %v579 = vld [vmem:[%s3 + $0x248] sm:$0xff]
  %v580 = vld [vmem:[%s3 + $0x250] sm:$0xff]
  %v581 = vld [vmem:[%s3 + $0x258] sm:$0xff]
  %v582 = vld [vmem:[%s3 + $0x260] sm:$0xff]
  %v583 = vld [vmem:[%s3 + $0x268] sm:$0xff]
  %v584 = vld [vmem:[%s3 + $0x270] sm:$0xff]
  %v585 = vld [vmem:[%s3 + $0x278] sm:$0xff]
  %v586 = vld [vmem:[%s3 + $0x280] sm:$0xff]
  %v587 = vld [vmem:[%s3 + $0x288] sm:$0xff]
  %v588 = vld [vmem:[%s3 + $0x290] sm:$0xff]
  %v589 = vld [vmem:[%s3 + $0x298] sm:$0xff]
  %v590 = vld [vmem:[%s3 + $0x2a0] sm:$0xff]
  %v591 = vld [vmem:[%s3 + $0x2a8] sm:$0xff]
  %v592 = vld [vmem:[%s3 + $0x2b0] sm:$0xff]
  %v593 = vld [vmem:[%s3 + $0x2b8] sm:$0xff]
  %v594 = vld [vmem:[%s3 + $0x2c0] sm:$0xff]
  %v595 = vld [vmem:[%s3 + $0x2c8] sm:$0xff]
  %v596 = vld [vmem:[%s3 + $0x2d0] sm:$0xff]
  %v597 = vld [vmem:[%s3 + $0x2d8] sm:$0xff]
  %v598 = vld [vmem:[%s3 + $0x2e0] sm:$0xff]
  %v599 = vld [vmem:[%s3 + $0x2e8] sm:$0xff]
  %v600 = vld [vmem:[%s3 + $0x2f0] sm:$0xff]
  %v601 = vld [vmem:[%s3 + $0x2f8] sm:$0xff]
  %v602 = vld [vmem:[%s3 + $0x300] sm:$0xff]
  %v603 = vld [vmem:[%s3 + $0x308] sm:$0xff]
  %v604 = vld [vmem:[%s3 + $0x310] sm:$0xff]
  %v605 = vld [vmem:[%s3 + $0x318] sm:$0xff]
  %v606 = vld [vmem:[%s3 + $0x320] sm:$0xff]
  %v607 = vld [vmem:[%s3 + $0x328] sm:$0xff]
  %v608 = vld [vmem:[%s3 + $0x330] sm:$0xff]
  %v609 = vld [vmem:[%s3 + $0x338] sm:$0xff]
  %v610 = vld [vmem:[%s3 + $0x340] sm:$0xff]
  %v611 = vld [vmem:[%s3 + $0x348] sm:$0xff]
  %v612 = vld [vmem:[%s3 + $0x350] sm:$0xff]
  %v613 = vld [vmem:[%s3 + $0x358] sm:$0xff]
  %v614 = vld [vmem:[%s3 + $0x360] sm:$0xff]
  %v615 = vld [vmem:[%s3 + $0x368] sm:$0xff]
  %v616 = vld [vmem:[%s3 + $0x370] sm:$0xff]
  %v617 = vld [vmem:[%s3 + $0x378] sm:$0xff]
  %v618 = vld [vmem:[%s3 + $0x380] sm:$0xff]
  %v619 = vld [vmem:[%s3 + $0x388] sm:$0xff]
  %v620 = vld [vmem:[%s3 + $0x390] sm:$0xff]
  %v621 = vld [vmem:[%s3 + $0x398] sm:$0xff]
  %v622 = vld [vmem:[%s3 + $0x3a0] sm:$0xff]
  %v623 = vld [vmem:[%s3 + $0x3a8] sm:$0xff]
  %v624 = vld [vmem:[%s3 + $0x3b0] sm:$0xff]
  %v625 = vld [vmem:[%s3 + $0x3b8] sm:$0xff]
  %v626 = vld [vmem:[%s3 + $0x3c0] sm:$0xff]
  %v627 = vld [vmem:[%s3 + $0x3c8] sm:$0xff]
  %v628 = vld [vmem:[%s3 + $0x3d0] sm:$0xff]
  %v629 = vld [vmem:[%s3 + $0x3d8] sm:$0xff]
  %v630 = vld [vmem:[%s3 + $0x3e0] sm:$0xff]
  %v631 = vld [vmem:[%s3 + $0x3e8] sm:$0xff]
  %v632 = vld [vmem:[%s3 + $0x3f0] sm:$0xff]
  %v633 = vld [vmem:[%s3 + $0x3f8] sm:$0xff]
  %v634 = vld [vmem:[%s4] sm:$0x1]
  %v636 = vlaneseq
  %v637 = vshrl.u32 %v636, 7
  %v638 = vsub.s32 0, %v637
  %v639 = vrot.slane %v634, %v638
  %641 = vmatprep.subr.mxu0 0.0
  %642 = vmatpush1.msra.mxu0 %v506
  %643 = vmatprep.subr.mxu0 0.0
  %644 = vmatpush1.msra.mxu0 %v507
  %645 = vmatprep.subr.mxu0 0.0
  %646 = vmatpush1.msra.mxu0 %v508
  %647 = vmatprep.subr.mxu0 0.0
  %648 = vmatpush1.msra.mxu0 %v509
  %649 = vmatprep.subr.mxu0 0.0
  %650 = vmatpush1.msra.mxu0 %v510
  %651 = vmatprep.subr.mxu0 0.0
  %652 = vmatpush1.msra.mxu0 %v511
  %653 = vmatprep.subr.mxu0 0.0
  %654 = vmatpush1.msra.mxu0 %v512
  %655 = vmatprep.subr.mxu0 0.0
  %656 = vmatpush1.msra.mxu0 %v513
  %657 = vmatprep.subr.mxu0 0.0
  %658 = vmatpush1.msra.mxu0 %v514
  %659 = vmatprep.subr.mxu0 0.0
  %660 = vmatpush1.msra.mxu0 %v515
  %661 = vmatprep.subr.mxu0 0.0
  %662 = vmatpush1.msra.mxu0 %v516
  %663 = vmatprep.subr.mxu0 0.0
  %664 = vmatpush1.msra.mxu0 %v517
  %665 = vmatprep.subr.mxu0 0.0
  %666 = vmatpush1.msra.mxu0 %v518
  %667 = vmatprep.subr.mxu0 0.0
  %668 = vmatpush1.msra.mxu0 %v519
  %669 = vmatprep.subr.mxu0 0.0
  %670 = vmatpush1.msra.mxu0 %v520
  %671 = vmatprep.subr.mxu0 0.0
  %672 = vmatpush1.msra.mxu0 %v521
  %673 = vmatprep.subr.mxu0 0.0
  %674 = vmatpush1.msra.mxu0 %v522
  %675 = vmatprep.subr.mxu0 0.0
  %676 = vmatpush1.msra.mxu0 %v523
  %677 = vmatprep.subr.mxu0 0.0
  %678 = vmatpush1.msra.mxu0 %v524
  %679 = vmatprep.subr.mxu0 0.0
  %680 = vmatpush1.msra.mxu0 %v525
  %681 = vmatprep.subr.mxu0 0.0
  %682 = vmatpush1.msra.mxu0 %v526
  %683 = vmatprep.subr.mxu0 0.0
  %684 = vmatpush1.msra.mxu0 %v527
  %685 = vmatprep.subr.mxu0 0.0
  %686 = vmatpush1.msra.mxu0 %v528
  %687 = vmatprep.subr.mxu0 0.0
  %688 = vmatpush1.msra.mxu0 %v529
  %689 = vmatprep.subr.mxu0 0.0
  %690 = vmatpush1.msra.mxu0 %v530
  %691 = vmatprep.subr.mxu0 0.0
  %692 = vmatpush1.msra.mxu0 %v531
  %693 = vmatprep.subr.mxu0 0.0
  %694 = vmatpush1.msra.mxu0 %v532
  %695 = vmatprep.subr.mxu0 0.0
  %696 = vmatpush1.msra.mxu0 %v533
  %697 = vmatprep.subr.mxu0 0.0
  %698 = vmatpush1.msra.mxu0 %v534
  %699 = vmatprep.subr.mxu0 0.0
  %700 = vmatpush1.msra.mxu0 %v535
  %701 = vmatprep.subr.mxu0 0.0
  %702 = vmatpush1.msra.mxu0 %v536
  %703 = vmatprep.subr.mxu0 0.0
  %704 = vmatpush1.msra.mxu0 %v537
  %705 = vmatprep.mubr.f32.mxu0 %v499
  %706 = vmatmul.mubr.f32.gmra.mrb[0].mxu0 %v498
  %v707 = vpop.f32.mrb[0].mxu0
  %v708 = vadd.f32 %v639, %v707
  %v709 = vpop.f32.mrb[0].mxu0
  %710 = vdwg.mxu0
  %711 = vmatprep.subr.mxu0 0.0
  %712 = vmatpush1.msra.mxu0 %v538
  %713 = vmatprep.subr.mxu0 0.0
  %714 = vmatpush1.msra.mxu0 %v539
  %715 = vmatprep.subr.mxu0 0.0
  %716 = vmatpush1.msra.mxu0 %v540
  %717 = vmatprep.subr.mxu0 0.0
  %718 = vmatpush1.msra.mxu0 %v541
  %719 = vmatprep.subr.mxu0 0.0
  %720 = vmatpush1.msra.mxu0 %v542
  %721 = vmatprep.subr.mxu0 0.0
  %722 = vmatpush1.msra.mxu0 %v543
  %723 = vmatprep.subr.mxu0 0.0
  %724 = vmatpush1.msra.mxu0 %v544
  %725 = vmatprep.subr.mxu0 0.0
  %726 = vmatpush1.msra.mxu0 %v545
  %727 = vmatprep.subr.mxu0 0.0
  %728 = vmatpush1.msra.mxu0 %v546
  %729 = vmatprep.subr.mxu0 0.0
  %730 = vmatpush1.msra.mxu0 %v547
  %731 = vmatprep.subr.mxu0 0.0
  %732 = vmatpush1.msra.mxu0 %v548
  %733 = vmatprep.subr.mxu0 0.0
  %734 = vmatpush1.msra.mxu0 %v549
  %735 = vmatprep.subr.mxu0 0.0
  %736 = vmatpush1.msra.mxu0 %v550
  %737 = vmatprep.subr.mxu0 0.0
  %738 = vmatpush1.msra.mxu0 %v551
  %739 = vmatprep.subr.mxu0 0.0
  %740 = vmatpush1.msra.mxu0 %v552
  %741 = vmatprep.subr.mxu0 0.0
  %742 = vmatpush1.msra.mxu0 %v553
  %743 = vmatprep.subr.mxu0 0.0
  %744 = vmatpush1.msra.mxu0 %v554
  %745 = vmatprep.subr.mxu0 0.0
  %746 = vmatpush1.msra.mxu0 %v555
  %747 = vmatprep.subr.mxu0 0.0
  %748 = vmatpush1.msra.mxu0 %v556
  %749 = vmatprep.subr.mxu0 0.0
  %750 = vmatpush1.msra.mxu0 %v557
  %751 = vmatprep.subr.mxu0 0.0
  %752 = vmatpush1.msra.mxu0 %v558
  %753 = vmatprep.subr.mxu0 0.0
  %754 = vmatpush1.msra.mxu0 %v559
  %755 = vmatprep.subr.mxu0 0.0
  %756 = vmatpush1.msra.mxu0 %v560
  %757 = vmatprep.subr.mxu0 0.0
  %758 = vmatpush1.msra.mxu0 %v561
  %759 = vmatprep.subr.mxu0 0.0
  %760 = vmatpush1.msra.mxu0 %v562
  %761 = vmatprep.subr.mxu0 0.0
  %762 = vmatpush1.msra.mxu0 %v563
  %763 = vmatprep.subr.mxu0 0.0
  %764 = vmatpush1.msra.mxu0 %v564
  %765 = vmatprep.subr.mxu0 0.0
  %766 = vmatpush1.msra.mxu0 %v565
  %767 = vmatprep.subr.mxu0 0.0
  %768 = vmatpush1.msra.mxu0 %v566
  %769 = vmatprep.subr.mxu0 0.0
  %770 = vmatpush1.msra.mxu0 %v567
  %771 = vmatprep.subr.mxu0 0.0
  %772 = vmatpush1.msra.mxu0 %v568
  %773 = vmatprep.subr.mxu0 0.0
  %774 = vmatpush1.msra.mxu0 %v569
  %775 = vmatprep.mubr.f32.mxu0 %v501
  %776 = vmatmul.mubr.f32.gmra.mrb[0].mxu0 %v500
  %v777 = vpop.f32.mrb[0].mxu0
  %v778 = vadd.f32 %v708, %v777
  %v779 = vpop.f32.mrb[0].mxu0
  %780 = vdwg.mxu0
  %781 = vmatprep.subr.mxu0 0.0
  %782 = vmatpush1.msra.mxu0 %v570
  %783 = vmatprep.subr.mxu0 0.0
  %784 = vmatpush1.msra.mxu0 %v571
  %785 = vmatprep.subr.mxu0 0.0
  %786 = vmatpush1.msra.mxu0 %v572
  %787 = vmatprep.subr.mxu0 0.0
  %788 = vmatpush1.msra.mxu0 %v573
  %789 = vmatprep.subr.mxu0 0.0
  %790 = vmatpush1.msra.mxu0 %v574
  %791 = vmatprep.subr.mxu0 0.0
  %792 = vmatpush1.msra.mxu0 %v575
  %793 = vmatprep.subr.mxu0 0.0
  %794 = vmatpush1.msra.mxu0 %v576
  %795 = vmatprep.subr.mxu0 0.0
  %796 = vmatpush1.msra.mxu0 %v577
  %797 = vmatprep.subr.mxu0 0.0
  %798 = vmatpush1.msra.mxu0 %v578
  %799 = vmatprep.subr.mxu0 0.0
  %800 = vmatpush1.msra.mxu0 %v579
  %801 = vmatprep.subr.mxu0 0.0
  %802 = vmatpush1.msra.mxu0 %v580
  %803 = vmatprep.subr.mxu0 0.0
  %804 = vmatpush1.msra.mxu0 %v581
  %805 = vmatprep.subr.mxu0 0.0
  %806 = vmatpush1.msra.mxu0 %v582
  %807 = vmatprep.subr.mxu0 0.0
  %808 = vmatpush1.msra.mxu0 %v583
  %809 = vmatprep.subr.mxu0 0.0
  %810 = vmatpush1.msra.mxu0 %v584
  %811 = vmatprep.subr.mxu0 0.0
  %812 = vmatpush1.msra.mxu0 %v585
  %813 = vmatprep.subr.mxu0 0.0
  %814 = vmatpush1.msra.mxu0 %v586
  %815 = vmatprep.subr.mxu0 0.0
  %816 = vmatpush1.msra.mxu0 %v587
  %817 = vmatprep.subr.mxu0 0.0
  %818 = vmatpush1.msra.mxu0 %v588
  %819 = vmatprep.subr.mxu0 0.0
  %820 = vmatpush1.msra.mxu0 %v589
  %821 = vmatprep.subr.mxu0 0.0
  %822 = vmatpush1.msra.mxu0 %v590
  %823 = vmatprep.subr.mxu0 0.0
  %824 = vmatpush1.msra.mxu0 %v591
  %825 = vmatprep.subr.mxu0 0.0
  %826 = vmatpush1.msra.mxu0 %v592
  %827 = vmatprep.subr.mxu0 0.0
  %828 = vmatpush1.msra.mxu0 %v593
  %829 = vmatprep.subr.mxu0 0.0
  %830 = vmatpush1.msra.mxu0 %v594
  %831 = vmatprep.subr.mxu0 0.0
  %832 = vmatpush1.msra.mxu0 %v595
  %833 = vmatprep.subr.mxu0 0.0
  %834 = vmatpush1.msra.mxu0 %v596
  %835 = vmatprep.subr.mxu0 0.0
  %836 = vmatpush1.msra.mxu0 %v597
  %837 = vmatprep.subr.mxu0 0.0
  %838 = vmatpush1.msra.mxu0 %v598
  %839 = vmatprep.subr.mxu0 0.0
  %840 = vmatpush1.msra.mxu0 %v599
  %841 = vmatprep.subr.mxu0 0.0
  %842 = vmatpush1.msra.mxu0 %v600
  %843 = vmatprep.subr.mxu0 0.0
  %844 = vmatpush1.msra.mxu0 %v601
  %845 = vmatprep.mubr.f32.mxu0 %v503
  %846 = vmatmul.mubr.f32.gmra.mrb[0].mxu0 %v502
  %v847 = vpop.f32.mrb[0].mxu0
  %v848 = vadd.f32 %v778, %v847
  %v849 = vpop.f32.mrb[0].mxu0
  %850 = vdwg.mxu0
  %851 = vmatprep.subr.mxu0 0.0
  %852 = vmatpush1.msra.mxu0 %v602
  %853 = vmatprep.subr.mxu0 0.0
  %854 = vmatpush1.msra.mxu0 %v603
  %855 = vmatprep.subr.mxu0 0.0
  %856 = vmatpush1.msra.mxu0 %v604
  %857 = vmatprep.subr.mxu0 0.0
  %858 = vmatpush1.msra.mxu0 %v605
  %859 = vmatprep.subr.mxu0 0.0
  %860 = vmatpush1.msra.mxu0 %v606
  %861 = vmatprep.subr.mxu0 0.0
  %862 = vmatpush1.msra.mxu0 %v607
  %863 = vmatprep.subr.mxu0 0.0
  %864 = vmatpush1.msra.mxu0 %v608
  %865 = vmatprep.subr.mxu0 0.0
  %866 = vmatpush1.msra.mxu0 %v609
  %867 = vmatprep.subr.mxu0 0.0
  %868 = vmatpush1.msra.mxu0 %v610
  %869 = vmatprep.subr.mxu0 0.0
  %870 = vmatpush1.msra.mxu0 %v611
  %871 = vmatprep.subr.mxu0 0.0
  %872 = vmatpush1.msra.mxu0 %v612
  %873 = vmatprep.subr.mxu0 0.0
  %874 = vmatpush1.msra.mxu0 %v613
  %875 = vmatprep.subr.mxu0 0.0
  %876 = vmatpush1.msra.mxu0 %v614
  %877 = vmatprep.subr.mxu0 0.0
  %878 = vmatpush1.msra.mxu0 %v615
  %879 = vmatprep.subr.mxu0 0.0
  %880 = vmatpush1.msra.mxu0 %v616
  %881 = vmatprep.subr.mxu0 0.0
  %882 = vmatpush1.msra.mxu0 %v617
  %883 = vmatprep.subr.mxu0 0.0
  %884 = vmatpush1.msra.mxu0 %v618
  %885 = vmatprep.subr.mxu0 0.0
  %886 = vmatpush1.msra.mxu0 %v619
  %887 = vmatprep.subr.mxu0 0.0
  %888 = vmatpush1.msra.mxu0 %v620
  %889 = vmatprep.subr.mxu0 0.0
  %890 = vmatpush1.msra.mxu0 %v621
  %891 = vmatprep.subr.mxu0 0.0
  %892 = vmatpush1.msra.mxu0 %v622
  %893 = vmatprep.subr.mxu0 0.0
  %894 = vmatpush1.msra.mxu0 %v623
  %895 = vmatprep.subr.mxu0 0.0
  %896 = vmatpush1.msra.mxu0 %v624
  %897 = vmatprep.subr.mxu0 0.0
  %898 = vmatpush1.msra.mxu0 %v625
  %899 = vmatprep.subr.mxu0 0.0
  %900 = vmatpush1.msra.mxu0 %v626
  %901 = vmatprep.subr.mxu0 0.0
  %902 = vmatpush1.msra.mxu0 %v627
  %903 = vmatprep.subr.mxu0 0.0
  %904 = vmatpush1.msra.mxu0 %v628
  %905 = vmatprep.subr.mxu0 0.0
  %906 = vmatpush1.msra.mxu0 %v629
  %907 = vmatprep.subr.mxu0 0.0
  %908 = vmatpush1.msra.mxu0 %v630
  %909 = vmatprep.subr.mxu0 0.0
  %910 = vmatpush1.msra.mxu0 %v631
  %911 = vmatprep.subr.mxu0 0.0
  %912 = vmatpush1.msra.mxu0 %v632
  %913 = vmatprep.subr.mxu0 0.0
  %914 = vmatpush1.msra.mxu0 %v633
  %915 = vmatprep.mubr.f32.mxu0 %v505
  %916 = vmatmul.mubr.f32.gmra.mrb[0].mxu0 %v504
  %v917 = vpop.f32.mrb[0].mxu0
  %v918 = vadd.f32 %v848, %v917
  %v919 = vpop.f32.mrb[0].mxu0
  %920 = vdwg.mxu0
  %v921 = vmax.f32 %v918, 0.0
  %v922 = vld [vmem:[%s5] sm:$0xff]
  %v923 = vld [vmem:[%s5 + $0x8] sm:$0xff]
  %v924 = vld [vmem:[%s5 + $0x10] sm:$0xff]
  %v925 = vld [vmem:[%s5 + $0x18] sm:$0xff]
  %v926 = vld [vmem:[%s6] sm:$0x1]
  %v928 = vlaneseq
  %v929 = vshrl.u32 %v928, 7
  %v930 = vsub.s32 0, %v929
  %v931 = vrot.slane %v926, %v930
  %vm933 = vcmask 261120
  %v935 = vsel %vm933, %v921, 0
  %937 = vmatprep.subr.mxu0 0.0
  %938 = vmatpush1.msra.mxu0 %v922
  %939 = vmatprep.subr.mxu0 0.0
  %940 = vmatpush1.msra.mxu0 %v923
  %941 = vmatprep.subr.mxu0 0.0
  %942 = vmatpush1.msra.mxu0 %v924
  %943 = vmatprep.subr.mxu0 0.0
  %944 = vmatpush1.msra.mxu0 %v925
  %945 = vmatprep.subr.mxu0 0.0
  %946 = vmatpush1.msra.mxu0 0.0
  %947 = vmatprep.subr.mxu0 0.0
  %948 = vmatpush1.msra.mxu0 0.0
  %949 = vmatprep.subr.mxu0 0.0
  %950 = vmatpush1.msra.mxu0 0.0
  %951 = vmatprep.subr.mxu0 0.0
  %952 = vmatpush1.msra.mxu0 0.0
  %953 = vmatprep.subr.mxu0 0.0
  %954 = vmatpush1.msra.mxu0 0.0
  %955 = vmatprep.subr.mxu0 0.0
  %956 = vmatpush1.msra.mxu0 0.0
  %957 = vmatprep.subr.mxu0 0.0
  %958 = vmatpush1.msra.mxu0 0.0
  %959 = vmatprep.subr.mxu0 0.0
  %960 = vmatpush1.msra.mxu0 0.0
  %961 = vmatprep.subr.mxu0 0.0
  %962 = vmatpush1.msra.mxu0 0.0
  %963 = vmatprep.subr.mxu0 0.0
  %964 = vmatpush1.msra.mxu0 0.0
  %965 = vmatprep.subr.mxu0 0.0
  %966 = vmatpush1.msra.mxu0 0.0
  %967 = vmatprep.subr.mxu0 0.0
  %968 = vmatpush1.msra.mxu0 0.0
  %969 = vmatprep.subr.mxu0 0.0
  %970 = vmatpush1.msra.mxu0 0.0
  %971 = vmatprep.subr.mxu0 0.0
  %972 = vmatpush1.msra.mxu0 0.0
  %973 = vmatprep.subr.mxu0 0.0
  %974 = vmatpush1.msra.mxu0 0.0
  %975 = vmatprep.subr.mxu0 0.0
  %976 = vmatpush1.msra.mxu0 0.0
  %977 = vmatprep.subr.mxu0 0.0
  %978 = vmatpush1.msra.mxu0 0.0
  %979 = vmatprep.subr.mxu0 0.0
  %980 = vmatpush1.msra.mxu0 0.0
  %981 = vmatprep.subr.mxu0 0.0
  %982 = vmatpush1.msra.mxu0 0.0
  %983 = vmatprep.subr.mxu0 0.0
  %984 = vmatpush1.msra.mxu0 0.0
  %985 = vmatprep.subr.mxu0 0.0
  %986 = vmatpush1.msra.mxu0 0.0
  %987 = vmatprep.subr.mxu0 0.0
  %988 = vmatpush1.msra.mxu0 0.0
  %989 = vmatprep.subr.mxu0 0.0
  %990 = vmatpush1.msra.mxu0 0.0
  %991 = vmatprep.subr.mxu0 0.0
  %992 = vmatpush1.msra.mxu0 0.0
  %993 = vmatprep.subr.mxu0 0.0
  %994 = vmatpush1.msra.mxu0 0.0
  %995 = vmatprep.subr.mxu0 0.0
  %996 = vmatpush1.msra.mxu0 0.0
  %997 = vmatprep.subr.mxu0 0.0
  %998 = vmatpush1.msra.mxu0 0.0
  %999 = vmatprep.subr.mxu0 0.0
  %1000 = vmatpush1.msra.mxu0 0.0
  %1001 = vmatprep.mubr.f32.mxu0 0.0
  %1002 = vmatmul.mubr.f32.gmra.mrb[0].mxu0 %v935
  %v1003 = vpop.f32.mrb[0].mxu0
  %v1004 = vadd.f32 %v931, %v1003
  %v1005 = vpop.f32.mrb[0].mxu0
  %1006 = vdwg.mxu0
  %1007 = vst [vmem:[%s12] sm:$0xff] %v1004
  %v1008 = vld [vmem:[%s7] sm:$0xff]
  %v1009 = vld [vmem:[%s7 + $0x8] sm:$0xff]
  %v1010 = vld [vmem:[%s7 + $0x10] sm:$0xff]
  %v1011 = vld [vmem:[%s7 + $0x18] sm:$0xff]
  %v1012 = vld [vmem:[%s7 + $0x20] sm:$0xff]
  %v1013 = vld [vmem:[%s7 + $0x28] sm:$0xff]
  %v1014 = vld [vmem:[%s7 + $0x30] sm:$0xff]
  %v1015 = vld [vmem:[%s7 + $0x38] sm:$0xff]
  %v1016 = vld [vmem:[%s7 + $0x40] sm:$0xff]
  %v1017 = vld [vmem:[%s7 + $0x48] sm:$0xff]
  %v1018 = vld [vmem:[%s7 + $0x50] sm:$0xff]
  %v1019 = vld [vmem:[%s7 + $0x58] sm:$0xff]
  %v1020 = vld [vmem:[%s7 + $0x60] sm:$0xff]
  %v1021 = vld [vmem:[%s7 + $0x68] sm:$0xff]
  %v1022 = vld [vmem:[%s7 + $0x70] sm:$0xff]
  %v1023 = vld [vmem:[%s7 + $0x78] sm:$0xff]
  %v1024 = vld [vmem:[%s8] sm:$0x1]
  %v1026 = vlaneseq
  %v1027 = vshrl.u32 %v1026, 7
  %v1028 = vsub.s32 0, %v1027
  %v1029 = vrot.slane %v1024, %v1028
  %1031 = vmatprep.subr.mxu0 0.0
  %1032 = vmatpush1.msra.mxu0 %v1008
  %1033 = vmatprep.subr.mxu0 0.0
  %1034 = vmatpush1.msra.mxu0 %v1009
  %1035 = vmatprep.subr.mxu0 0.0
  %1036 = vmatpush1.msra.mxu0 %v1010
  %1037 = vmatprep.subr.mxu0 0.0
  %1038 = vmatpush1.msra.mxu0 %v1011
  %1039 = vmatprep.subr.mxu0 0.0
  %1040 = vmatpush1.msra.mxu0 %v1012
  %1041 = vmatprep.subr.mxu0 0.0
  %1042 = vmatpush1.msra.mxu0 %v1013
  %1043 = vmatprep.subr.mxu0 0.0
  %1044 = vmatpush1.msra.mxu0 %v1014
  %1045 = vmatprep.subr.mxu0 0.0
  %1046 = vmatpush1.msra.mxu0 %v1015
  %1047 = vmatprep.subr.mxu0 0.0
  %1048 = vmatpush1.msra.mxu0 %v1016
  %1049 = vmatprep.subr.mxu0 0.0
  %1050 = vmatpush1.msra.mxu0 %v1017
  %1051 = vmatprep.subr.mxu0 0.0
  %1052 = vmatpush1.msra.mxu0 %v1018
  %1053 = vmatprep.subr.mxu0 0.0
  %1054 = vmatpush1.msra.mxu0 %v1019
  %1055 = vmatprep.subr.mxu0 0.0
  %1056 = vmatpush1.msra.mxu0 %v1020
  %1057 = vmatprep.subr.mxu0 0.0
  %1058 = vmatpush1.msra.mxu0 %v1021
  %1059 = vmatprep.subr.mxu0 0.0
  %1060 = vmatpush1.msra.mxu0 %v1022
  %1061 = vmatprep.subr.mxu0 0.0
  %1062 = vmatpush1.msra.mxu0 %v1023
  %1063 = vmatprep.subr.mxu0 0.0
  %1064 = vmatpush1.msra.mxu0 0.0
  %1065 = vmatprep.subr.mxu0 0.0
  %1066 = vmatpush1.msra.mxu0 0.0
  %1067 = vmatprep.subr.mxu0 0.0
  %1068 = vmatpush1.msra.mxu0 0.0
  %1069 = vmatprep.subr.mxu0 0.0
  %1070 = vmatpush1.msra.mxu0 0.0
  %1071 = vmatprep.subr.mxu0 0.0
  %1072 = vmatpush1.msra.mxu0 0.0
  %1073 = vmatprep.subr.mxu0 0.0
  %1074 = vmatpush1.msra.mxu0 0.0
  %1075 = vmatprep.subr.mxu0 0.0
  %1076 = vmatpush1.msra.mxu0 0.0
  %1077 = vmatprep.subr.mxu0 0.0
  %1078 = vmatpush1.msra.mxu0 0.0
  %1079 = vmatprep.subr.mxu0 0.0
  %1080 = vmatpush1.msra.mxu0 0.0
  %1081 = vmatprep.subr.mxu0 0.0
  %1082 = vmatpush1.msra.mxu0 0.0
  %1083 = vmatprep.subr.mxu0 0.0
  %1084 = vmatpush1.msra.mxu0 0.0
  %1085 = vmatprep.subr.mxu0 0.0
  %1086 = vmatpush1.msra.mxu0 0.0
  %1087 = vmatprep.subr.mxu0 0.0
  %1088 = vmatpush1.msra.mxu0 0.0
  %1089 = vmatprep.subr.mxu0 0.0
  %1090 = vmatpush1.msra.mxu0 0.0
  %1091 = vmatprep.subr.mxu0 0.0
  %1092 = vmatpush1.msra.mxu0 0.0
  %1093 = vmatprep.subr.mxu0 0.0
  %1094 = vmatpush1.msra.mxu0 0.0
  %1095 = vmatprep.mubr.f32.mxu0 0.0
  %1096 = vmatmul.mubr.f32.gmra.mrb[0].mxu0 %v1004
  %v1097 = vpop.f32.mrb[0].mxu0
  %v1098 = vadd.f32 %v1029, %v1097
  %v1099 = vpop.f32.mrb[0].mxu0
  %1100 = vdwg.mxu0
  %v1101 = vmax.f32 %v1098, 0.0
  %v1102 = vld [vmem:[%s9] sm:$0xff]
  %v1103 = vld [vmem:[%s9 + $0x8] sm:$0xff]
  %v1104 = vld [vmem:[%s9 + $0x10] sm:$0xff]
  %v1105 = vld [vmem:[%s9 + $0x18] sm:$0xff]
  %v1106 = vld [vmem:[%s9 + $0x20] sm:$0xff]
  %v1107 = vld [vmem:[%s9 + $0x28] sm:$0xff]
  %v1108 = vld [vmem:[%s9 + $0x30] sm:$0xff]
  %v1109 = vld [vmem:[%s9 + $0x38] sm:$0xff]
  %v1110 = vld [vmem:[%s10] sm:$0x1]
  %v1112 = vlaneseq
  %v1113 = vshrl.u32 %v1112, 7
  %v1114 = vsub.s32 0, %v1113
  %v1115 = vrot.slane %v1110, %v1114
  %vm1117 = vcmask 523264
  %v1119 = vsel %vm1117, %v1101, 0
  %1121 = vmatprep.subr.mxu0 0.0
  %1122 = vmatpush1.msra.mxu0 %v1102
  %1123 = vmatprep.subr.mxu0 0.0
  %1124 = vmatpush1.msra.mxu0 %v1103
  %1125 = vmatprep.subr.mxu0 0.0
  %1126 = vmatpush1.msra.mxu0 %v1104
  %1127 = vmatprep.subr.mxu0 0.0
  %1128 = vmatpush1.msra.mxu0 %v1105
  %1129 = vmatprep.subr.mxu0 0.0
  %1130 = vmatpush1.msra.mxu0 %v1106
  %1131 = vmatprep.subr.mxu0 0.0
  %1132 = vmatpush1.msra.mxu0 %v1107
  %1133 = vmatprep.subr.mxu0 0.0
  %1134 = vmatpush1.msra.mxu0 %v1108
  %1135 = vmatprep.subr.mxu0 0.0
  %1136 = vmatpush1.msra.mxu0 %v1109
  %1137 = vmatprep.subr.mxu0 0.0
  %1138 = vmatpush1.msra.mxu0 0.0
  %1139 = vmatprep.subr.mxu0 0.0
  %1140 = vmatpush1.msra.mxu0 0.0
  %1141 = vmatprep.subr.mxu0 0.0
  %1142 = vmatpush1.msra.mxu0 0.0
  %1143 = vmatprep.subr.mxu0 0.0
  %1144 = vmatpush1.msra.mxu0 0.0
  %1145 = vmatprep.subr.mxu0 0.0
  %1146 = vmatpush1.msra.mxu0 0.0
  %1147 = vmatprep.subr.mxu0 0.0
  %1148 = vmatpush1.msra.mxu0 0.0
  %1149 = vmatprep.subr.mxu0 0.0
  %1150 = vmatpush1.msra.mxu0 0.0
  %1151 = vmatprep.subr.mxu0 0.0
  %1152 = vmatpush1.msra.mxu0 0.0
  %1153 = vmatprep.subr.mxu0 0.0
  %1154 = vmatpush1.msra.mxu0 0.0
  %1155 = vmatprep.subr.mxu0 0.0
  %1156 = vmatpush1.msra.mxu0 0.0
  %1157 = vmatprep.subr.mxu0 0.0
  %1158 = vmatpush1.msra.mxu0 0.0
  %1159 = vmatprep.subr.mxu0 0.0
  %1160 = vmatpush1.msra.mxu0 0.0
  %1161 = vmatprep.subr.mxu0 0.0
  %1162 = vmatpush1.msra.mxu0 0.0
  %1163 = vmatprep.subr.mxu0 0.0
  %1164 = vmatpush1.msra.mxu0 0.0
  %1165 = vmatprep.subr.mxu0 0.0
  %1166 = vmatpush1.msra.mxu0 0.0
  %1167 = vmatprep.subr.mxu0 0.0
  %1168 = vmatpush1.msra.mxu0 0.0
  %1169 = vmatprep.subr.mxu0 0.0
  %1170 = vmatpush1.msra.mxu0 0.0
  %1171 = vmatprep.subr.mxu0 0.0
  %1172 = vmatpush1.msra.mxu0 0.0
  %1173 = vmatprep.subr.mxu0 0.0
  %1174 = vmatpush1.msra.mxu0 0.0
  %1175 = vmatprep.subr.mxu0 0.0
  %1176 = vmatpush1.msra.mxu0 0.0
  %1177 = vmatprep.subr.mxu0 0.0
  %1178 = vmatpush1.msra.mxu0 0.0
  %1179 = vmatprep.subr.mxu0 0.0
  %1180 = vmatpush1.msra.mxu0 0.0
  %1181 = vmatprep.subr.mxu0 0.0
  %1182 = vmatpush1.msra.mxu0 0.0
  %1183 = vmatprep.subr.mxu0 0.0
  %1184 = vmatpush1.msra.mxu0 0.0
  %1185 = vmatprep.mubr.f32.mxu0 0.0
  %1186 = vmatmul.mubr.f32.gmra.mrb[0].mxu0 %v1119
  %v1187 = vpop.f32.mrb[0].mxu0
  %v1188 = vadd.f32 %v1115, %v1187
  %v1189 = vpop.f32.mrb[0].mxu0
  %1190 = vdwg.mxu0
  %v1191 = vlaneseq
  %v1192 = vand.u32 %v1191, 127
  %vm1193 = vcmp.lt.s32.totalorder %v1192, 3
  %v1194 = vmul.f32 %v1188, 1.442695
  %v1195 = vpow.pop %v1194
  %v1196 = vsel %vm1193, %v1188, %v1195
  %v1197 = vld [vmem:[%s11] sm:$0x3f]
  %v1198 = vld [vmem:[%s11 + $0x8] sm:$0x3f]
  %vm1199 = vcmask 48128
  %v1201 = vsel %vm1199, %v1196, 0
  %vm1203 = vcmask 1045504
  %v1205 = vsel %vm1203, %v1197, 0
  %v1208 = vsel %vm1203, %v1198, 0
  %1210 = vmatprep.subr.mxu0 %v1208
  %1211 = vmatpush1.msra.mxu0 %v1205
  %1212 = vmatprep.subr.mxu0 0.0
  %1213 = vmatpush1.msra.mxu0 0.0
  %1214 = vmatprep.subr.mxu0 0.0
  %1215 = vmatpush1.msra.mxu0 0.0
  %1216 = vmatprep.subr.mxu0 0.0
  %1217 = vmatpush1.msra.mxu0 0.0
  %1218 = vmatprep.subr.mxu0 0.0
  %1219 = vmatpush1.msra.mxu0 0.0
  %1220 = vmatprep.subr.mxu0 0.0
  %1221 = vmatpush1.msra.mxu0 0.0
  %1222 = vmatprep.subr.mxu0 0.0
  %1223 = vmatpush1.msra.mxu0 0.0
  %1224 = vmatprep.subr.mxu0 0.0
  %1225 = vmatpush1.msra.mxu0 0.0
  %1226 = vmatprep.subr.mxu0 0.0
  %1227 = vmatpush1.msra.mxu0 0.0
  %1228 = vmatprep.subr.mxu0 0.0
  %1229 = vmatpush1.msra.mxu0 0.0
  %1230 = vmatprep.subr.mxu0 0.0
  %1231 = vmatpush1.msra.mxu0 0.0
  %1232 = vmatprep.subr.mxu0 0.0
  %1233 = vmatpush1.msra.mxu0 0.0
  %1234 = vmatprep.subr.mxu0 0.0
  %1235 = vmatpush1.msra.mxu0 0.0
  %1236 = vmatprep.subr.mxu0 0.0
  %1237 = vmatpush1.msra.mxu0 0.0
  %1238 = vmatprep.subr.mxu0 0.0
  %1239 = vmatpush1.msra.mxu0 0.0
  %1240 = vmatprep.subr.mxu0 0.0
  %1241 = vmatpush1.msra.mxu0 0.0
  %1242 = vmatprep.subr.mxu0 0.0
  %1243 = vmatpush1.msra.mxu0 0.0
  %1244 = vmatprep.subr.mxu0 0.0
  %1245 = vmatpush1.msra.mxu0 0.0
  %1246 = vmatprep.subr.mxu0 0.0
  %1247 = vmatpush1.msra.mxu0 0.0
  %1248 = vmatprep.subr.mxu0 0.0
  %1249 = vmatpush1.msra.mxu0 0.0
  %1250 = vmatprep.subr.mxu0 0.0
  %1251 = vmatpush1.msra.mxu0 0.0
  %1252 = vmatprep.subr.mxu0 0.0
  %1253 = vmatpush1.msra.mxu0 0.0
  %1254 = vmatprep.subr.mxu0 0.0
  %1255 = vmatpush1.msra.mxu0 0.0
  %1256 = vmatprep.subr.mxu0 0.0
  %1257 = vmatpush1.msra.mxu0 0.0
  %1258 = vmatprep.subr.mxu0 0.0
  %1259 = vmatpush1.msra.mxu0 0.0
  %1260 = vmatprep.subr.mxu0 0.0
  %1261 = vmatpush1.msra.mxu0 0.0
  %1262 = vmatprep.subr.mxu0 0.0
  %1263 = vmatpush1.msra.mxu0 0.0
  %1264 = vmatprep.subr.mxu0 0.0
  %1265 = vmatpush1.msra.mxu0 0.0
  %1266 = vmatprep.subr.mxu0 0.0
  %1267 = vmatpush1.msra.mxu0 0.0
  %1268 = vmatprep.subr.mxu0 0.0
  %1269 = vmatpush1.msra.mxu0 0.0
  %1270 = vmatprep.subr.mxu0 0.0
  %1271 = vmatpush1.msra.mxu0 0.0
  %1272 = vmatprep.subr.mxu0 0.0
  %1273 = vmatpush1.msra.mxu0 0.0
  %1274 = vmatprep.mubr.f32.mxu0 0.0
  %1275 = vmatmul.mubr.f32.gmra.mrb[0].mxu0 %v1201
  %v1276 = vpop.f32.mrb[0].mxu0
  %v1277 = vadd.f32 0.0, %v1276
  %v1278 = vpop.f32.mrb[0].mxu0
  %v1279 = vadd.f32 0.0, %v1278
  %1280 = vdwg.mxu0
  %1281 = vst [vmem:[%s13] sm:$0xff] %v1277
  %1282 = vst [vmem:[%s13 + $0x8] sm:$0xff] %v1279
  // Predicated region
  $region50: #{teja_vae_cpd_forward.1} parent=0 // pred_check
    _
  $region51: #{teja_vae_cpd_forward.1} parent=0 // pred_check_branch
    %1284 = sbr.rel (0) target = $region53
  $region52: #{teja_vae_cpd_forward.1} parent=0 // pred_region
    _
  $region53: #{teja_vae_cpd_forward.1} parent=0 // pred_fallthru
    _
  // Predicated region
  $region54: #{teja_vae_cpd_forward.1} parent=0 // pred_check
    _
  $region55: #{teja_vae_cpd_forward.1} parent=0 // pred_check_branch
    %1286 = sbr.rel (0) target = $region57
  $region56: #{teja_vae_cpd_forward.1} parent=0 // pred_region
    _
  $region57: #{teja_vae_cpd_forward.1} parent=0 // pred_fallthru
    _
  // Predicated region
  $region58: #{teja_vae_cpd_forward.1} parent=0 // pred_check
    _
  $region59: #{teja_vae_cpd_forward.1} parent=0 // pred_check_branch
    %1288 = sbr.rel (0) target = $region61
  $region60: #{teja_vae_cpd_forward.1} parent=0 // pred_region
    _
  $region61: #{teja_vae_cpd_forward.1} parent=0 // pred_fallthru
    _
  // Predicated region
  $region62: #{teja_vae_cpd_forward.1} parent=0 // pred_check
    _
  $region63: #{teja_vae_cpd_forward.1} parent=0 // pred_check_branch
    %1290 = sbr.rel (0) target = $region65
  $region64: #{teja_vae_cpd_forward.1} parent=0 // pred_region
    _
  $region65: #{teja_vae_cpd_forward.1} parent=0 // pred_fallthru
    _

</llo_original>
